<compile_context>
chip_gen: v5e
topology: v5e:2x2
jax: 0.10.0
libtpu: 0.0.40
codegen_flags: <defaults>
</compile_context>

<pallas_src>
import functools

import jax
import jax.numpy as jnp
from jax.experimental import pallas as pl
from jax.experimental.pallas import tpu as pltpu


def _round_up(n, m):
    return (n + m - 1) // m * m


def _multicae_kernel(x_ref, row_ref, col_ref,
                     enc_w_ref, dec_w_ref, enc_b_ref, dec_b_ref,
                     out_ref, patch_ref, *, H, W, n_layer):
    # x_ref:     (1, Cp, H*W)                 activations, flat spatial in lanes
    # row_ref:   (1, H*W) int32               spatial row of each flat position
    # col_ref:   (1, H*W) int32               spatial col of each flat position
    # enc_w_ref: (L, Kp, 9*Cp)                im2col matmul weights (encoder)
    # dec_w_ref: (L, Cp, 9*Kp)                im2col matmul weights (decoder)
    # enc_b_ref: (L, Kp, 1), dec_b_ref: (L, Cp, 1)
    # out_ref:   (1, Cp, H*W)
    # patch_ref: (9*max(Cp,Kp), H*W) f32      VMEM scratch for im2col patches
    HW = H * W
    row = row_ref[...]                         # (1, HW) int32
    col = col_ref[...]                         # (1, HW) int32

    # --- masks hoisted once, reused by every conv tap of every layer ---------
    row_even = (row % 2) == 0
    col_even = (col % 2) == 0
    m_u = row >= 1                             # dy = -1 stays inside the image
    m_d = row < (H - 1)                        # dy = +1
    m_l = col >= 1                             # dx = -1
    m_r = col < (W - 1)                        # dx = +1
    tap_masks = {
        (-1, -1): m_u & m_l, (-1, 0): m_u,  (-1, 1): m_u & m_r,
        (0, -1):  m_l,       (0, 0):  None, (0, 1):  m_r,
        (1, -1):  m_d & m_l, (1, 0):  m_d,  (1, 1):  m_d & m_r,
    }

    def shift(x, dy, dx):
        """Value of x at flat position p + dy*W + dx (wrap-around; callers mask
        or never select wrapped positions)."""
        off = dy * W + dx
        if off == 0:
            return x
        # jnp.roll semantics: out[p] = x[(p - shift) % HW] -> shift = (-off) % HW
        return pltpu.roll(x, shift=(-off) % HW, axis=1)

    def conv3x3_relu(x, w2d, bias):
        """3x3 'same' cross-correlation + bias + ReLU as one im2col matmul.

        x: (Cq, HW) f32;  w2d: (Cr, 9*Cq) f32;  bias: (Cr, 1) f32  ->  (Cr, HW)
        Cq is a multiple of 8, so every patch store is a full aligned tile write.
        """
        cq = x.shape[0]
        t = 0
        for dy in (-1, 0, 1):
            for dx in (-1, 0, 1):
                s = shift(x, dy, dx)
                m = tap_masks[(dy, dx)]
                patch_ref[pl.ds(t * cq, cq), :] = s if m is None else jnp.where(m, s, 0.0)
                t += 1
        patch = patch_ref[pl.ds(0, 9 * cq), :]                  # (9*Cq, HW)
        acc = jnp.dot(w2d, patch, preferred_element_type=jnp.float32)
        return jnp.maximum(acc + bias, 0.0)

    def pool_unpool(x):
        """MaxPool2d(2) immediately followed by MaxUnpool2d(2): the max of every
        non-overlapping 2x2 window stays at its original position (first
        occurrence in row-major window order wins on ties), everything else -> 0.
        4 rolls total."""
        # Horizontal partner inside the 2x2 window.
        xr = jnp.where(col_even, shift(x, 0, 1), shift(x, 0, -1))
        pair = jnp.maximum(x, xr)                               # max of own row pair
        # Max of the other row's pair inside the window.
        pair_o = jnp.where(row_even, shift(pair, 1, 0), shift(pair, -1, 0))
        wmax = jnp.maximum(pair, pair_o)
        # keep iff this position holds the window max AND no earlier (row-major)
        # position inside the window also holds it:
        #   pos0 (r even, c even): always first
        #   pos1 (r even, c odd):  needs xr     (=pos0)         != max
        #   pos2 (r odd,  c even): needs pair_o (=max(pos0,1))  != max
        #   pos3 (r odd,  c odd):  needs xr (=pos2) and pair_o  != max
        keep = ((x == wmax)
                & (col_even | (xr != wmax))
                & (row_even | (pair_o != wmax)))
        return jnp.where(keep, x, 0.0)

    x = x_ref[0]                                                # (Cp, HW) f32
    for layer in range(n_layer):
        enc = conv3x3_relu(x, enc_w_ref[layer], enc_b_ref[layer])   # (Kp, HW)
        unp = pool_unpool(enc)
        x = conv3x3_relu(unp, dec_w_ref[layer], dec_b_ref[layer])   # (Cp, HW)
    out_ref[0] = x


def init_multicae_params(key, in_dim, code_dim, n_layer):
    """Parameters matching CAE.__init__ (encoder Conv2d weight xavier_normal_,
    biases zero, decoder ConvTranspose2d weight = flip_trans(encoder.weight)),
    pre-arranged as channel-padded im2col matmul weights for the fused kernel.

    With Cp = round_up(in_dim, 8), Kp = round_up(code_dim, 8):
      encoder:  enc_w2d[co, (a*3+b)*Cp + ci] = W_e[co, ci, a, b]   (zeros in pads)
      decoder:  ConvTranspose2d(weight=flip_trans(W_e), pad=1) == plain conv with
                cross-correlation kernel K[o, a, b, i] = W_e[i, o, b, a]:
                dec_w2d[o, (a*3+b)*Kp + i] = W_e[i, o, b, a]        (zeros in pads)
    Padded rows/cols are zero, so padded channels stay exactly zero end-to-end.
    """
    cp = _round_up(in_dim, 8)
    kp = _round_up(code_dim, 8)
    fan_in = in_dim * 9
    fan_out = code_dim * 9
    std = (2.0 / (fan_in + fan_out)) ** 0.5
    enc_ws, dec_ws = [], []
    for _ in range(n_layer):
        key, sub = jax.random.split(key)
        w = std * jax.random.normal(sub, (code_dim, in_dim, 3, 3), jnp.float32)
        wp = jnp.zeros((kp, cp, 3, 3), jnp.float32).at[:code_dim, :in_dim].set(w)
        enc_ws.append(jnp.transpose(wp, (0, 2, 3, 1)).reshape(kp, 9 * cp))
        dec_ws.append(jnp.transpose(wp, (1, 3, 2, 0)).reshape(cp, 9 * kp))
    enc_w = jnp.stack(enc_ws)                                   # (L, Kp, 9*Cp)
    dec_w = jnp.stack(dec_ws)                                   # (L, Cp, 9*Kp)
    enc_b = jnp.zeros((n_layer, kp, 1), jnp.float32)
    dec_b = jnp.zeros((n_layer, cp, 1), jnp.float32)
    return enc_w, dec_w, enc_b, dec_b


@jax.jit
def multi_cae_forward(x_nchw, enc_w, dec_w, enc_b, dec_b):
    """MultiCAE forward. Accepts/returns NCHW like the PyTorch module."""
    B, Cin, H, W = x_nchw.shape
    n_layer, Kp, nine_cp = enc_w.shape
    Cp = nine_cp // 9
    if H % 2 or W % 2:
        raise ValueError("MaxPool2d(2)/MaxUnpool2d(2) requires even H and W")
    HW = H * W

    x = x_nchw.reshape(B, Cin, HW).astype(jnp.float32)
    if Cp != Cin:
        x = jnp.pad(x, ((0, 0), (0, Cp - Cin), (0, 0)))         # zero pad channels

    flat = jnp.arange(HW, dtype=jnp.int32)
    rowmap = (flat // W).reshape(1, HW)
    colmap = (flat % W).reshape(1, HW)
    cmax = max(Cp, Kp)

    kernel = functools.partial(_multicae_kernel, H=H, W=W, n_layer=n_layer)
    out = pl.pallas_call(
        kernel,
        out_shape=jax.ShapeDtypeStruct((B, Cp, HW), jnp.float32),
        grid=(B,),
        in_specs=[
            pl.BlockSpec((1, Cp, HW), lambda i: (i, 0, 0)),
            pl.BlockSpec((1, HW), lambda i: (0, 0)),
            pl.BlockSpec((1, HW), lambda i: (0, 0)),
            pl.BlockSpec((n_layer, Kp, 9 * Cp), lambda i: (0, 0, 0)),
            pl.BlockSpec((n_layer, Cp, 9 * Kp), lambda i: (0, 0, 0)),
            pl.BlockSpec((n_layer, Kp, 1), lambda i: (0, 0, 0)),
            pl.BlockSpec((n_layer, Cp, 1), lambda i: (0, 0, 0)),
        ],
        out_specs=pl.BlockSpec((1, Cp, HW), lambda i: (i, 0, 0)),
        scratch_shapes=[pltpu.VMEM((9 * cmax, HW), jnp.float32)],
        compiler_params=pltpu.CompilerParams(
            dimension_semantics=("parallel",)),
    )(x, rowmap, colmap, enc_w, dec_w, enc_b, dec_b)
    return out[:, :Cin, :].reshape(B, Cin, H, W)


if __name__ == "__main__":
    key = jax.random.PRNGKey(0)
    k_x, k_p = jax.random.split(key)

    B, in_dim, H, W = 2, 4, 16, 16
    code_dim, n_layer = 8, 2

    x = jax.random.normal(k_x, (B, in_dim, H, W), jnp.float32)
    enc_w, dec_w, enc_b, dec_b = init_multicae_params(k_p, in_dim, code_dim, n_layer)

    y = multi_cae_forward(x, enc_w, dec_w, enc_b, dec_b)
    jax.block_until_ready(y)

    assert y.shape == (B, in_dim, H, W)
    assert bool(jnp.all(jnp.isfinite(y)))
    assert bool(jnp.all(y >= 0.0))  # final ReLU
    print("KERNEL_OK")
</pallas_src>

<mosaic_0001>
module attributes {stable_mosaic.version = 11 : i64} {
  func.func @_multicae_kernel(%arg0: i32, %arg1: memref<1x8x256xf32, #tpu.memory_space<vmem>>, %arg2: memref<1x256xi32, #tpu.memory_space<vmem>>, %arg3: memref<1x256xi32, #tpu.memory_space<vmem>>, %arg4: memref<2x8x72xf32, #tpu.memory_space<vmem>>, %arg5: memref<2x8x72xf32, #tpu.memory_space<vmem>>, %arg6: memref<2x8x1xf32, #tpu.memory_space<vmem>>, %arg7: memref<2x8x1xf32, #tpu.memory_space<vmem>>, %arg8: memref<1x8x256xf32, #tpu.memory_space<vmem>>, %arg9: memref<72x256xf32, #tpu.memory_space<vmem>>) attributes {dimension_semantics = [#tpu.dimension_semantics<parallel>], iteration_bounds = array<i64: 2>, scalar_prefetch = 0 : i64, scratch_operands = 1 : i64, tpu.core_type = #tpu.core_type<tc>, window_params = [{transform_indices = @transform_0, window_bounds = array<i64: 1, 8, 256>}, {pipeline_mode = #tpu.pipeline_mode<synchronous>, transform_indices = @transform_1, window_bounds = array<i64: 1, 256>}, {pipeline_mode = #tpu.pipeline_mode<synchronous>, transform_indices = @transform_2, window_bounds = array<i64: 1, 256>}, {pipeline_mode = #tpu.pipeline_mode<synchronous>, transform_indices = @transform_3, window_bounds = array<i64: 2, 8, 72>}, {pipeline_mode = #tpu.pipeline_mode<synchronous>, transform_indices = @transform_4, window_bounds = array<i64: 2, 8, 72>}, {pipeline_mode = #tpu.pipeline_mode<synchronous>, transform_indices = @transform_5, window_bounds = array<i64: 2, 8, 1>}, {pipeline_mode = #tpu.pipeline_mode<synchronous>, transform_indices = @transform_6, window_bounds = array<i64: 2, 8, 1>}, {transform_indices = @transform_7, window_bounds = array<i64: 1, 8, 256>}]} {
    %c0 = arith.constant 0 : index
    %c0_0 = arith.constant 0 : index
    %0 = vector.load %arg2[%c0, %c0_0] : memref<1x256xi32, #tpu.memory_space<vmem>>, vector<1x256xi32>
    %c0_1 = arith.constant 0 : index
    %c0_2 = arith.constant 0 : index
    %1 = vector.load %arg3[%c0_1, %c0_2] : memref<1x256xi32, #tpu.memory_space<vmem>>, vector<1x256xi32>
    %c2_i32 = arith.constant 2 : i32
    %c0_i32 = arith.constant 0 : i32
    %2 = arith.cmpi eq, %c2_i32, %c0_i32 : i32
    %c1_i32 = arith.constant 1 : i32
    %3 = arith.select %2, %c1_i32, %c2_i32 : i32
    %4 = vector.broadcast %3 : i32 to vector<1x256xi32>
    %5 = arith.remsi %0, %4 : vector<1x256xi32>
    %c0_i32_3 = arith.constant 0 : i32
    %6 = vector.broadcast %c0_i32_3 : i32 to vector<1x256xi32>
    %7 = arith.cmpi ne, %5, %6 : vector<1x256xi32>
    %c0_i32_4 = arith.constant 0 : i32
    %8 = vector.broadcast %c0_i32_4 : i32 to vector<1x256xi32>
    %9 = arith.cmpi slt, %5, %8 : vector<1x256xi32>
    %c0_i32_5 = arith.constant 0 : i32
    %10 = arith.cmpi slt, %3, %c0_i32_5 : i32
    %11 = vector.broadcast %10 : i1 to vector<1x256xi1>
    %12 = vector.broadcast %11 : vector<1x256xi1> to vector<1x256xi1>
    %13 = arith.xori %9, %12 : vector<1x256xi1>
    %14 = arith.andi %13, %7 : vector<1x256xi1>
    %15 = vector.broadcast %3 : i32 to vector<1x256xi32>
    %16 = arith.addi %5, %15 : vector<1x256xi32>
    %17 = arith.select %14, %16, %5 : vector<1x256xi1>, vector<1x256xi32>
    %c0_i32_6 = arith.constant 0 : i32
    %18 = vector.broadcast %c0_i32_6 : i32 to vector<1x256xi32>
    %19 = arith.cmpi eq, %17, %18 : vector<1x256xi32>
    %c2_i32_7 = arith.constant 2 : i32
    %c0_i32_8 = arith.constant 0 : i32
    %20 = arith.cmpi eq, %c2_i32_7, %c0_i32_8 : i32
    %c1_i32_9 = arith.constant 1 : i32
    %21 = arith.select %20, %c1_i32_9, %c2_i32_7 : i32
    %22 = vector.broadcast %21 : i32 to vector<1x256xi32>
    %23 = arith.remsi %1, %22 : vector<1x256xi32>
    %c0_i32_10 = arith.constant 0 : i32
    %24 = vector.broadcast %c0_i32_10 : i32 to vector<1x256xi32>
    %25 = arith.cmpi ne, %23, %24 : vector<1x256xi32>
    %c0_i32_11 = arith.constant 0 : i32
    %26 = vector.broadcast %c0_i32_11 : i32 to vector<1x256xi32>
    %27 = arith.cmpi slt, %23, %26 : vector<1x256xi32>
    %c0_i32_12 = arith.constant 0 : i32
    %28 = arith.cmpi slt, %21, %c0_i32_12 : i32
    %29 = vector.broadcast %28 : i1 to vector<1x256xi1>
    %30 = vector.broadcast %29 : vector<1x256xi1> to vector<1x256xi1>
    %31 = arith.xori %27, %30 : vector<1x256xi1>
    %32 = arith.andi %31, %25 : vector<1x256xi1>
    %33 = vector.broadcast %21 : i32 to vector<1x256xi32>
    %34 = arith.addi %23, %33 : vector<1x256xi32>
    %35 = arith.select %32, %34, %23 : vector<1x256xi1>, vector<1x256xi32>
    %c0_i32_13 = arith.constant 0 : i32
    %36 = vector.broadcast %c0_i32_13 : i32 to vector<1x256xi32>
    %37 = arith.cmpi eq, %35, %36 : vector<1x256xi32>
    %c1_i32_14 = arith.constant 1 : i32
    %38 = vector.broadcast %c1_i32_14 : i32 to vector<1x256xi32>
    %39 = arith.cmpi sge, %0, %38 : vector<1x256xi32>
    %c15_i32 = arith.constant 15 : i32
    %40 = vector.broadcast %c15_i32 : i32 to vector<1x256xi32>
    %41 = arith.cmpi slt, %0, %40 : vector<1x256xi32>
    %c1_i32_15 = arith.constant 1 : i32
    %42 = vector.broadcast %c1_i32_15 : i32 to vector<1x256xi32>
    %43 = arith.cmpi sge, %1, %42 : vector<1x256xi32>
    %c15_i32_16 = arith.constant 15 : i32
    %44 = vector.broadcast %c15_i32_16 : i32 to vector<1x256xi32>
    %45 = arith.cmpi slt, %1, %44 : vector<1x256xi32>
    %46 = arith.andi %39, %43 : vector<1x256xi1>
    %47 = arith.andi %39, %45 : vector<1x256xi1>
    %48 = arith.andi %41, %43 : vector<1x256xi1>
    %49 = arith.andi %41, %45 : vector<1x256xi1>
    %c0_17 = arith.constant 0 : index
    %c0_18 = arith.constant 0 : index
    %c0_19 = arith.constant 0 : index
    %50 = vector.load %arg1[%c0_17, %c0_18, %c0_19] : memref<1x8x256xf32, #tpu.memory_space<vmem>>, vector<1x8x256xf32>
    %51 = vector.shape_cast %50 : vector<1x8x256xf32> to vector<8x256xf32>
    %c0_20 = arith.constant 0 : index
    %c0_21 = arith.constant 0 : index
    %c0_22 = arith.constant 0 : index
    %52 = vector.load %arg4[%c0_20, %c0_21, %c0_22] : memref<2x8x72xf32, #tpu.memory_space<vmem>>, vector<1x8x72xf32>
    %53 = vector.shape_cast %52 : vector<1x8x72xf32> to vector<8x72xf32>
    %c0_23 = arith.constant 0 : index
    %c0_24 = arith.constant 0 : index
    %c0_25 = arith.constant 0 : index
    %54 = vector.load %arg6[%c0_23, %c0_24, %c0_25] : memref<2x8x1xf32, #tpu.memory_space<vmem>>, vector<1x8x1xf32>
    %55 = vector.shape_cast %54 : vector<1x8x1xf32> to vector<8x1xf32>
    %c17_i32 = arith.constant 17 : i32
    %56 = tpu.dynamic_rotate %51 by %c17_i32 dim 1 : vector<8x256xf32>, i32 -> vector<8x256xf32>
    %cst = arith.constant 0.000000e+00 : f32
    %57 = vector.shape_cast %46 : vector<1x256xi1> to vector<1x256xi1>
    %58 = vector.broadcast %57 : vector<1x256xi1> to vector<8x256xi1>
    %59 = vector.broadcast %cst : f32 to vector<8x256xf32>
    %60 = arith.select %58, %56, %59 : vector<8x256xi1>, vector<8x256xf32>
    %c0_26 = arith.constant 0 : index
    %c0_27 = arith.constant 0 : index
    %61 = vector.load %arg9[%c0_26, %c0_27] : memref<72x256xf32, #tpu.memory_space<vmem>>, vector<8x256xf32>
    tpu.vector_store %arg9[%c0_26, %c0_27], %60 {strides = array<i32>} : memref<72x256xf32, #tpu.memory_space<vmem>>, vector<8x256xf32>,
    %c16_i32 = arith.constant 16 : i32
    %62 = tpu.dynamic_rotate %51 by %c16_i32 dim 1 : vector<8x256xf32>, i32 -> vector<8x256xf32>
    %cst_28 = arith.constant 0.000000e+00 : f32
    %63 = vector.shape_cast %39 : vector<1x256xi1> to vector<1x256xi1>
    %64 = vector.broadcast %63 : vector<1x256xi1> to vector<8x256xi1>
    %65 = vector.broadcast %cst_28 : f32 to vector<8x256xf32>
    %66 = arith.select %64, %62, %65 : vector<8x256xi1>, vector<8x256xf32>
    %c8 = arith.constant 8 : index
    %c0_29 = arith.constant 0 : index
    %67 = vector.load %arg9[%c8, %c0_29] : memref<72x256xf32, #tpu.memory_space<vmem>>, vector<8x256xf32>
    tpu.vector_store %arg9[%c8, %c0_29], %66 {strides = array<i32>} : memref<72x256xf32, #tpu.memory_space<vmem>>, vector<8x256xf32>,
    %c15_i32_30 = arith.constant 15 : i32
    %68 = tpu.dynamic_rotate %51 by %c15_i32_30 dim 1 : vector<8x256xf32>, i32 -> vector<8x256xf32>
    %cst_31 = arith.constant 0.000000e+00 : f32
    %69 = vector.shape_cast %47 : vector<1x256xi1> to vector<1x256xi1>
    %70 = vector.broadcast %69 : vector<1x256xi1> to vector<8x256xi1>
    %71 = vector.broadcast %cst_31 : f32 to vector<8x256xf32>
    %72 = arith.select %70, %68, %71 : vector<8x256xi1>, vector<8x256xf32>
    %c16 = arith.constant 16 : index
    %c0_32 = arith.constant 0 : index
    %73 = vector.load %arg9[%c16, %c0_32] : memref<72x256xf32, #tpu.memory_space<vmem>>, vector<8x256xf32>
    tpu.vector_store %arg9[%c16, %c0_32], %72 {strides = array<i32>} : memref<72x256xf32, #tpu.memory_space<vmem>>, vector<8x256xf32>,
    %c1_i32_33 = arith.constant 1 : i32
    %74 = tpu.dynamic_rotate %51 by %c1_i32_33 dim 1 : vector<8x256xf32>, i32 -> vector<8x256xf32>
    %cst_34 = arith.constant 0.000000e+00 : f32
    %75 = vector.shape_cast %43 : vector<1x256xi1> to vector<1x256xi1>
    %76 = vector.broadcast %75 : vector<1x256xi1> to vector<8x256xi1>
    %77 = vector.broadcast %cst_34 : f32 to vector<8x256xf32>
    %78 = arith.select %76, %74, %77 : vector<8x256xi1>, vector<8x256xf32>
    %c24 = arith.constant 24 : index
    %c0_35 = arith.constant 0 : index
    %79 = vector.load %arg9[%c24, %c0_35] : memref<72x256xf32, #tpu.memory_space<vmem>>, vector<8x256xf32>
    tpu.vector_store %arg9[%c24, %c0_35], %78 {strides = array<i32>} : memref<72x256xf32, #tpu.memory_space<vmem>>, vector<8x256xf32>,
    %c32 = arith.constant 32 : index
    %c0_36 = arith.constant 0 : index
    %80 = vector.load %arg9[%c32, %c0_36] : memref<72x256xf32, #tpu.memory_space<vmem>>, vector<8x256xf32>
    tpu.vector_store %arg9[%c32, %c0_36], %51 {strides = array<i32>} : memref<72x256xf32, #tpu.memory_space<vmem>>, vector<8x256xf32>,
    %c255_i32 = arith.constant 255 : i32
    %81 = tpu.dynamic_rotate %51 by %c255_i32 dim 1 : vector<8x256xf32>, i32 -> vector<8x256xf32>
    %cst_37 = arith.constant 0.000000e+00 : f32
    %82 = vector.shape_cast %45 : vector<1x256xi1> to vector<1x256xi1>
    %83 = vector.broadcast %82 : vector<1x256xi1> to vector<8x256xi1>
    %84 = vector.broadcast %cst_37 : f32 to vector<8x256xf32>
    %85 = arith.select %83, %81, %84 : vector<8x256xi1>, vector<8x256xf32>
    %c40 = arith.constant 40 : index
    %c0_38 = arith.constant 0 : index
    %86 = vector.load %arg9[%c40, %c0_38] : memref<72x256xf32, #tpu.memory_space<vmem>>, vector<8x256xf32>
    tpu.vector_store %arg9[%c40, %c0_38], %85 {strides = array<i32>} : memref<72x256xf32, #tpu.memory_space<vmem>>, vector<8x256xf32>,
    %c241_i32 = arith.constant 241 : i32
    %87 = tpu.dynamic_rotate %51 by %c241_i32 dim 1 : vector<8x256xf32>, i32 -> vector<8x256xf32>
    %cst_39 = arith.constant 0.000000e+00 : f32
    %88 = vector.shape_cast %48 : vector<1x256xi1> to vector<1x256xi1>
    %89 = vector.broadcast %88 : vector<1x256xi1> to vector<8x256xi1>
    %90 = vector.broadcast %cst_39 : f32 to vector<8x256xf32>
    %91 = arith.select %89, %87, %90 : vector<8x256xi1>, vector<8x256xf32>
    %c48 = arith.constant 48 : index
    %c0_40 = arith.constant 0 : index
    %92 = vector.load %arg9[%c48, %c0_40] : memref<72x256xf32, #tpu.memory_space<vmem>>, vector<8x256xf32>
    tpu.vector_store %arg9[%c48, %c0_40], %91 {strides = array<i32>} : memref<72x256xf32, #tpu.memory_space<vmem>>, vector<8x256xf32>,
    %c240_i32 = arith.constant 240 : i32
    %93 = tpu.dynamic_rotate %51 by %c240_i32 dim 1 : vector<8x256xf32>, i32 -> vector<8x256xf32>
    %cst_41 = arith.constant 0.000000e+00 : f32
    %94 = vector.shape_cast %41 : vector<1x256xi1> to vector<1x256xi1>
    %95 = vector.broadcast %94 : vector<1x256xi1> to vector<8x256xi1>
    %96 = vector.broadcast %cst_41 : f32 to vector<8x256xf32>
    %97 = arith.select %95, %93, %96 : vector<8x256xi1>, vector<8x256xf32>
    %c56 = arith.constant 56 : index
    %c0_42 = arith.constant 0 : index
    %98 = vector.load %arg9[%c56, %c0_42] : memref<72x256xf32, #tpu.memory_space<vmem>>, vector<8x256xf32>
    tpu.vector_store %arg9[%c56, %c0_42], %97 {strides = array<i32>} : memref<72x256xf32, #tpu.memory_space<vmem>>, vector<8x256xf32>,
    %c239_i32 = arith.constant 239 : i32
    %99 = tpu.dynamic_rotate %51 by %c239_i32 dim 1 : vector<8x256xf32>, i32 -> vector<8x256xf32>
    %cst_43 = arith.constant 0.000000e+00 : f32
    %100 = vector.shape_cast %49 : vector<1x256xi1> to vector<1x256xi1>
    %101 = vector.broadcast %100 : vector<1x256xi1> to vector<8x256xi1>
    %102 = vector.broadcast %cst_43 : f32 to vector<8x256xf32>
    %103 = arith.select %101, %99, %102 : vector<8x256xi1>, vector<8x256xf32>
    %c64 = arith.constant 64 : index
    %c0_44 = arith.constant 0 : index
    %104 = vector.load %arg9[%c64, %c0_44] : memref<72x256xf32, #tpu.memory_space<vmem>>, vector<8x256xf32>
    tpu.vector_store %arg9[%c64, %c0_44], %103 {strides = array<i32>} : memref<72x256xf32, #tpu.memory_space<vmem>>, vector<8x256xf32>,
    %c0_45 = arith.constant 0 : index
    %c0_46 = arith.constant 0 : index
    %105 = vector.load %arg9[%c0_45, %c0_46] : memref<72x256xf32, #tpu.memory_space<vmem>>, vector<72x256xf32>
    %cst_47 = arith.constant dense<0.000000e+00> : vector<8x256xf32>
    %106 = tpu.matmul %53, %105, %cst_47 {dimension_numbers = #tpu.dot_dimension_numbers<[1], [0], [0], [1], [0, 0, 1, 1], [], []>} : vector<8x72xf32>, vector<72x256xf32>, vector<8x256xf32> -> vector<8x256xf32>
    %107 = vector.broadcast %55 : vector<8x1xf32> to vector<8x256xf32>
    %108 = arith.addf %106, %107 : vector<8x256xf32>
    %cst_48 = arith.constant 0.000000e+00 : f32
    %109 = vector.broadcast %cst_48 : f32 to vector<8x256xf32>
    %110 = arith.maximumf %108, %109 : vector<8x256xf32>
    %c255_i32_49 = arith.constant 255 : i32
    %111 = tpu.dynamic_rotate %110 by %c255_i32_49 dim 1 : vector<8x256xf32>, i32 -> vector<8x256xf32>
    %c1_i32_50 = arith.constant 1 : i32
    %112 = tpu.dynamic_rotate %110 by %c1_i32_50 dim 1 : vector<8x256xf32>, i32 -> vector<8x256xf32>
    %113 = vector.shape_cast %37 : vector<1x256xi1> to vector<1x256xi1>
    %114 = vector.broadcast %113 : vector<1x256xi1> to vector<8x256xi1>
    %115 = arith.select %114, %111, %112 : vector<8x256xi1>, vector<8x256xf32>
    %116 = arith.maximumf %110, %115 : vector<8x256xf32>
    %c240_i32_51 = arith.constant 240 : i32
    %117 = tpu.dynamic_rotate %116 by %c240_i32_51 dim 1 : vector<8x256xf32>, i32 -> vector<8x256xf32>
    %c16_i32_52 = arith.constant 16 : i32
    %118 = tpu.dynamic_rotate %116 by %c16_i32_52 dim 1 : vector<8x256xf32>, i32 -> vector<8x256xf32>
    %119 = vector.shape_cast %19 : vector<1x256xi1> to vector<1x256xi1>
    %120 = vector.broadcast %119 : vector<1x256xi1> to vector<8x256xi1>
    %121 = arith.select %120, %117, %118 : vector<8x256xi1>, vector<8x256xf32>
    %122 = arith.maximumf %116, %121 : vector<8x256xf32>
    %123 = arith.cmpf oeq, %110, %122 : vector<8x256xf32>
    %124 = arith.cmpf one, %115, %122 : vector<8x256xf32>
    %125 = vector.broadcast %37 : vector<1x256xi1> to vector<8x256xi1>
    %126 = arith.ori %125, %124 : vector<8x256xi1>
    %127 = arith.andi %123, %126 : vector<8x256xi1>
    %128 = arith.cmpf one, %121, %122 : vector<8x256xf32>
    %129 = vector.broadcast %19 : vector<1x256xi1> to vector<8x256xi1>
    %130 = arith.ori %129, %128 : vector<8x256xi1>
    %131 = arith.andi %127, %130 : vector<8x256xi1>
    %cst_53 = arith.constant 0.000000e+00 : f32
    %132 = vector.broadcast %cst_53 : f32 to vector<8x256xf32>
    %133 = arith.select %131, %110, %132 : vector<8x256xi1>, vector<8x256xf32>
    %c0_54 = arith.constant 0 : index
    %c0_55 = arith.constant 0 : index
    %c0_56 = arith.constant 0 : index
    %134 = vector.load %arg5[%c0_54, %c0_55, %c0_56] : memref<2x8x72xf32, #tpu.memory_space<vmem>>, vector<1x8x72xf32>
    %135 = vector.shape_cast %134 : vector<1x8x72xf32> to vector<8x72xf32>
    %c0_57 = arith.constant 0 : index
    %c0_58 = arith.constant 0 : index
    %c0_59 = arith.constant 0 : index
    %136 = vector.load %arg7[%c0_57, %c0_58, %c0_59] : memref<2x8x1xf32, #tpu.memory_space<vmem>>, vector<1x8x1xf32>
    %137 = vector.shape_cast %136 : vector<1x8x1xf32> to vector<8x1xf32>
    %c17_i32_60 = arith.constant 17 : i32
    %138 = tpu.dynamic_rotate %133 by %c17_i32_60 dim 1 : vector<8x256xf32>, i32 -> vector<8x256xf32>
    %cst_61 = arith.constant 0.000000e+00 : f32
    %139 = vector.shape_cast %46 : vector<1x256xi1> to vector<1x256xi1>
    %140 = vector.broadcast %139 : vector<1x256xi1> to vector<8x256xi1>
    %141 = vector.broadcast %cst_61 : f32 to vector<8x256xf32>
    %142 = arith.select %140, %138, %141 : vector<8x256xi1>, vector<8x256xf32>
    %c0_62 = arith.constant 0 : index
    %c0_63 = arith.constant 0 : index
    %143 = vector.load %arg9[%c0_62, %c0_63] : memref<72x256xf32, #tpu.memory_space<vmem>>, vector<8x256xf32>
    tpu.vector_store %arg9[%c0_62, %c0_63], %142 {strides = array<i32>} : memref<72x256xf32, #tpu.memory_space<vmem>>, vector<8x256xf32>,
    %c16_i32_64 = arith.constant 16 : i32
    %144 = tpu.dynamic_rotate %133 by %c16_i32_64 dim 1 : vector<8x256xf32>, i32 -> vector<8x256xf32>
    %cst_65 = arith.constant 0.000000e+00 : f32
    %145 = vector.shape_cast %39 : vector<1x256xi1> to vector<1x256xi1>
    %146 = vector.broadcast %145 : vector<1x256xi1> to vector<8x256xi1>
    %147 = vector.broadcast %cst_65 : f32 to vector<8x256xf32>
    %148 = arith.select %146, %144, %147 : vector<8x256xi1>, vector<8x256xf32>
    %c8_66 = arith.constant 8 : index
    %c0_67 = arith.constant 0 : index
    %149 = vector.load %arg9[%c8_66, %c0_67] : memref<72x256xf32, #tpu.memory_space<vmem>>, vector<8x256xf32>
    tpu.vector_store %arg9[%c8_66, %c0_67], %148 {strides = array<i32>} : memref<72x256xf32, #tpu.memory_space<vmem>>, vector<8x256xf32>,
    %c15_i32_68 = arith.constant 15 : i32
    %150 = tpu.dynamic_rotate %133 by %c15_i32_68 dim 1 : vector<8x256xf32>, i32 -> vector<8x256xf32>
    %cst_69 = arith.constant 0.000000e+00 : f32
    %151 = vector.shape_cast %47 : vector<1x256xi1> to vector<1x256xi1>
    %152 = vector.broadcast %151 : vector<1x256xi1> to vector<8x256xi1>
    %153 = vector.broadcast %cst_69 : f32 to vector<8x256xf32>
    %154 = arith.select %152, %150, %153 : vector<8x256xi1>, vector<8x256xf32>
    %c16_70 = arith.constant 16 : index
    %c0_71 = arith.constant 0 : index
    %155 = vector.load %arg9[%c16_70, %c0_71] : memref<72x256xf32, #tpu.memory_space<vmem>>, vector<8x256xf32>
    tpu.vector_store %arg9[%c16_70, %c0_71], %154 {strides = array<i32>} : memref<72x256xf32, #tpu.memory_space<vmem>>, vector<8x256xf32>,
    %c1_i32_72 = arith.constant 1 : i32
    %156 = tpu.dynamic_rotate %133 by %c1_i32_72 dim 1 : vector<8x256xf32>, i32 -> vector<8x256xf32>
    %cst_73 = arith.constant 0.000000e+00 : f32
    %157 = vector.shape_cast %43 : vector<1x256xi1> to vector<1x256xi1>
    %158 = vector.broadcast %157 : vector<1x256xi1> to vector<8x256xi1>
    %159 = vector.broadcast %cst_73 : f32 to vector<8x256xf32>
    %160 = arith.select %158, %156, %159 : vector<8x256xi1>, vector<8x256xf32>
    %c24_74 = arith.constant 24 : index
    %c0_75 = arith.constant 0 : index
    %161 = vector.load %arg9[%c24_74, %c0_75] : memref<72x256xf32, #tpu.memory_space<vmem>>, vector<8x256xf32>
    tpu.vector_store %arg9[%c24_74, %c0_75], %160 {strides = array<i32>} : memref<72x256xf32, #tpu.memory_space<vmem>>, vector<8x256xf32>,
    %c32_76 = arith.constant 32 : index
    %c0_77 = arith.constant 0 : index
    %162 = vector.load %arg9[%c32_76, %c0_77] : memref<72x256xf32, #tpu.memory_space<vmem>>, vector<8x256xf32>
    tpu.vector_store %arg9[%c32_76, %c0_77], %133 {strides = array<i32>} : memref<72x256xf32, #tpu.memory_space<vmem>>, vector<8x256xf32>,
    %c255_i32_78 = arith.constant 255 : i32
    %163 = tpu.dynamic_rotate %133 by %c255_i32_78 dim 1 : vector<8x256xf32>, i32 -> vector<8x256xf32>
    %cst_79 = arith.constant 0.000000e+00 : f32
    %164 = vector.shape_cast %45 : vector<1x256xi1> to vector<1x256xi1>
    %165 = vector.broadcast %164 : vector<1x256xi1> to vector<8x256xi1>
    %166 = vector.broadcast %cst_79 : f32 to vector<8x256xf32>
    %167 = arith.select %165, %163, %166 : vector<8x256xi1>, vector<8x256xf32>
    %c40_80 = arith.constant 40 : index
    %c0_81 = arith.constant 0 : index
    %168 = vector.load %arg9[%c40_80, %c0_81] : memref<72x256xf32, #tpu.memory_space<vmem>>, vector<8x256xf32>
    tpu.vector_store %arg9[%c40_80, %c0_81], %167 {strides = array<i32>} : memref<72x256xf32, #tpu.memory_space<vmem>>, vector<8x256xf32>,
    %c241_i32_82 = arith.constant 241 : i32
    %169 = tpu.dynamic_rotate %133 by %c241_i32_82 dim 1 : vector<8x256xf32>, i32 -> vector<8x256xf32>
    %cst_83 = arith.constant 0.000000e+00 : f32
    %170 = vector.shape_cast %48 : vector<1x256xi1> to vector<1x256xi1>
    %171 = vector.broadcast %170 : vector<1x256xi1> to vector<8x256xi1>
    %172 = vector.broadcast %cst_83 : f32 to vector<8x256xf32>
    %173 = arith.select %171, %169, %172 : vector<8x256xi1>, vector<8x256xf32>
    %c48_84 = arith.constant 48 : index
    %c0_85 = arith.constant 0 : index
    %174 = vector.load %arg9[%c48_84, %c0_85] : memref<72x256xf32, #tpu.memory_space<vmem>>, vector<8x256xf32>
    tpu.vector_store %arg9[%c48_84, %c0_85], %173 {strides = array<i32>} : memref<72x256xf32, #tpu.memory_space<vmem>>, vector<8x256xf32>,
    %c240_i32_86 = arith.constant 240 : i32
    %175 = tpu.dynamic_rotate %133 by %c240_i32_86 dim 1 : vector<8x256xf32>, i32 -> vector<8x256xf32>
    %cst_87 = arith.constant 0.000000e+00 : f32
    %176 = vector.shape_cast %41 : vector<1x256xi1> to vector<1x256xi1>
    %177 = vector.broadcast %176 : vector<1x256xi1> to vector<8x256xi1>
    %178 = vector.broadcast %cst_87 : f32 to vector<8x256xf32>
    %179 = arith.select %177, %175, %178 : vector<8x256xi1>, vector<8x256xf32>
    %c56_88 = arith.constant 56 : index
    %c0_89 = arith.constant 0 : index
    %180 = vector.load %arg9[%c56_88, %c0_89] : memref<72x256xf32, #tpu.memory_space<vmem>>, vector<8x256xf32>
    tpu.vector_store %arg9[%c56_88, %c0_89], %179 {strides = array<i32>} : memref<72x256xf32, #tpu.memory_space<vmem>>, vector<8x256xf32>,
    %c239_i32_90 = arith.constant 239 : i32
    %181 = tpu.dynamic_rotate %133 by %c239_i32_90 dim 1 : vector<8x256xf32>, i32 -> vector<8x256xf32>
    %cst_91 = arith.constant 0.000000e+00 : f32
    %182 = vector.shape_cast %49 : vector<1x256xi1> to vector<1x256xi1>
    %183 = vector.broadcast %182 : vector<1x256xi1> to vector<8x256xi1>
    %184 = vector.broadcast %cst_91 : f32 to vector<8x256xf32>
    %185 = arith.select %183, %181, %184 : vector<8x256xi1>, vector<8x256xf32>
    %c64_92 = arith.constant 64 : index
    %c0_93 = arith.constant 0 : index
    %186 = vector.load %arg9[%c64_92, %c0_93] : memref<72x256xf32, #tpu.memory_space<vmem>>, vector<8x256xf32>
    tpu.vector_store %arg9[%c64_92, %c0_93], %185 {strides = array<i32>} : memref<72x256xf32, #tpu.memory_space<vmem>>, vector<8x256xf32>,
    %c0_94 = arith.constant 0 : index
    %c0_95 = arith.constant 0 : index
    %187 = vector.load %arg9[%c0_94, %c0_95] : memref<72x256xf32, #tpu.memory_space<vmem>>, vector<72x256xf32>
    %cst_96 = arith.constant dense<0.000000e+00> : vector<8x256xf32>
    %188 = tpu.matmul %135, %187, %cst_96 {dimension_numbers = #tpu.dot_dimension_numbers<[1], [0], [0], [1], [0, 0, 1, 1], [], []>} : vector<8x72xf32>, vector<72x256xf32>, vector<8x256xf32> -> vector<8x256xf32>
    %189 = vector.broadcast %137 : vector<8x1xf32> to vector<8x256xf32>
    %190 = arith.addf %188, %189 : vector<8x256xf32>
    %cst_97 = arith.constant 0.000000e+00 : f32
    %191 = vector.broadcast %cst_97 : f32 to vector<8x256xf32>
    %192 = arith.maximumf %190, %191 : vector<8x256xf32>
    %c1 = arith.constant 1 : index
    %c0_98 = arith.constant 0 : index
    %c0_99 = arith.constant 0 : index
    %193 = vector.load %arg4[%c1, %c0_98, %c0_99] : memref<2x8x72xf32, #tpu.memory_space<vmem>>, vector<1x8x72xf32>
    %194 = vector.shape_cast %193 : vector<1x8x72xf32> to vector<8x72xf32>
    %c1_100 = arith.constant 1 : index
    %c0_101 = arith.constant 0 : index
    %c0_102 = arith.constant 0 : index
    %195 = vector.load %arg6[%c1_100, %c0_101, %c0_102] : memref<2x8x1xf32, #tpu.memory_space<vmem>>, vector<1x8x1xf32>
    %196 = vector.shape_cast %195 : vector<1x8x1xf32> to vector<8x1xf32>
    %c17_i32_103 = arith.constant 17 : i32
    %197 = tpu.dynamic_rotate %192 by %c17_i32_103 dim 1 : vector<8x256xf32>, i32 -> vector<8x256xf32>
    %cst_104 = arith.constant 0.000000e+00 : f32
    %198 = vector.shape_cast %46 : vector<1x256xi1> to vector<1x256xi1>
    %199 = vector.broadcast %198 : vector<1x256xi1> to vector<8x256xi1>
    %200 = vector.broadcast %cst_104 : f32 to vector<8x256xf32>
    %201 = arith.select %199, %197, %200 : vector<8x256xi1>, vector<8x256xf32>
    %c0_105 = arith.constant 0 : index
    %c0_106 = arith.constant 0 : index
    %202 = vector.load %arg9[%c0_105, %c0_106] : memref<72x256xf32, #tpu.memory_space<vmem>>, vector<8x256xf32>
    tpu.vector_store %arg9[%c0_105, %c0_106], %201 {strides = array<i32>} : memref<72x256xf32, #tpu.memory_space<vmem>>, vector<8x256xf32>,
    %c16_i32_107 = arith.constant 16 : i32
    %203 = tpu.dynamic_rotate %192 by %c16_i32_107 dim 1 : vector<8x256xf32>, i32 -> vector<8x256xf32>
    %cst_108 = arith.constant 0.000000e+00 : f32
    %204 = vector.shape_cast %39 : vector<1x256xi1> to vector<1x256xi1>
    %205 = vector.broadcast %204 : vector<1x256xi1> to vector<8x256xi1>
    %206 = vector.broadcast %cst_108 : f32 to vector<8x256xf32>
    %207 = arith.select %205, %203, %206 : vector<8x256xi1>, vector<8x256xf32>
    %c8_109 = arith.constant 8 : index
    %c0_110 = arith.constant 0 : index
    %208 = vector.load %arg9[%c8_109, %c0_110] : memref<72x256xf32, #tpu.memory_space<vmem>>, vector<8x256xf32>
    tpu.vector_store %arg9[%c8_109, %c0_110], %207 {strides = array<i32>} : memref<72x256xf32, #tpu.memory_space<vmem>>, vector<8x256xf32>,
    %c15_i32_111 = arith.constant 15 : i32
    %209 = tpu.dynamic_rotate %192 by %c15_i32_111 dim 1 : vector<8x256xf32>, i32 -> vector<8x256xf32>
    %cst_112 = arith.constant 0.000000e+00 : f32
    %210 = vector.shape_cast %47 : vector<1x256xi1> to vector<1x256xi1>
    %211 = vector.broadcast %210 : vector<1x256xi1> to vector<8x256xi1>
    %212 = vector.broadcast %cst_112 : f32 to vector<8x256xf32>
    %213 = arith.select %211, %209, %212 : vector<8x256xi1>, vector<8x256xf32>
    %c16_113 = arith.constant 16 : index
    %c0_114 = arith.constant 0 : index
    %214 = vector.load %arg9[%c16_113, %c0_114] : memref<72x256xf32, #tpu.memory_space<vmem>>, vector<8x256xf32>
    tpu.vector_store %arg9[%c16_113, %c0_114], %213 {strides = array<i32>} : memref<72x256xf32, #tpu.memory_space<vmem>>, vector<8x256xf32>,
    %c1_i32_115 = arith.constant 1 : i32
    %215 = tpu.dynamic_rotate %192 by %c1_i32_115 dim 1 : vector<8x256xf32>, i32 -> vector<8x256xf32>
    %cst_116 = arith.constant 0.000000e+00 : f32
    %216 = vector.shape_cast %43 : vector<1x256xi1> to vector<1x256xi1>
    %217 = vector.broadcast %216 : vector<1x256xi1> to vector<8x256xi1>
    %218 = vector.broadcast %cst_116 : f32 to vector<8x256xf32>
    %219 = arith.select %217, %215, %218 : vector<8x256xi1>, vector<8x256xf32>
    %c24_117 = arith.constant 24 : index
    %c0_118 = arith.constant 0 : index
    %220 = vector.load %arg9[%c24_117, %c0_118] : memref<72x256xf32, #tpu.memory_space<vmem>>, vector<8x256xf32>
    tpu.vector_store %arg9[%c24_117, %c0_118], %219 {strides = array<i32>} : memref<72x256xf32, #tpu.memory_space<vmem>>, vector<8x256xf32>,
    %c32_119 = arith.constant 32 : index
    %c0_120 = arith.constant 0 : index
    %221 = vector.load %arg9[%c32_119, %c0_120] : memref<72x256xf32, #tpu.memory_space<vmem>>, vector<8x256xf32>
    tpu.vector_store %arg9[%c32_119, %c0_120], %192 {strides = array<i32>} : memref<72x256xf32, #tpu.memory_space<vmem>>, vector<8x256xf32>,
    %c255_i32_121 = arith.constant 255 : i32
    %222 = tpu.dynamic_rotate %192 by %c255_i32_121 dim 1 : vector<8x256xf32>, i32 -> vector<8x256xf32>
    %cst_122 = arith.constant 0.000000e+00 : f32
    %223 = vector.shape_cast %45 : vector<1x256xi1> to vector<1x256xi1>
    %224 = vector.broadcast %223 : vector<1x256xi1> to vector<8x256xi1>
    %225 = vector.broadcast %cst_122 : f32 to vector<8x256xf32>
    %226 = arith.select %224, %222, %225 : vector<8x256xi1>, vector<8x256xf32>
    %c40_123 = arith.constant 40 : index
    %c0_124 = arith.constant 0 : index
    %227 = vector.load %arg9[%c40_123, %c0_124] : memref<72x256xf32, #tpu.memory_space<vmem>>, vector<8x256xf32>
    tpu.vector_store %arg9[%c40_123, %c0_124], %226 {strides = array<i32>} : memref<72x256xf32, #tpu.memory_space<vmem>>, vector<8x256xf32>,
    %c241_i32_125 = arith.constant 241 : i32
    %228 = tpu.dynamic_rotate %192 by %c241_i32_125 dim 1 : vector<8x256xf32>, i32 -> vector<8x256xf32>
    %cst_126 = arith.constant 0.000000e+00 : f32
    %229 = vector.shape_cast %48 : vector<1x256xi1> to vector<1x256xi1>
    %230 = vector.broadcast %229 : vector<1x256xi1> to vector<8x256xi1>
    %231 = vector.broadcast %cst_126 : f32 to vector<8x256xf32>
    %232 = arith.select %230, %228, %231 : vector<8x256xi1>, vector<8x256xf32>
    %c48_127 = arith.constant 48 : index
    %c0_128 = arith.constant 0 : index
    %233 = vector.load %arg9[%c48_127, %c0_128] : memref<72x256xf32, #tpu.memory_space<vmem>>, vector<8x256xf32>
    tpu.vector_store %arg9[%c48_127, %c0_128], %232 {strides = array<i32>} : memref<72x256xf32, #tpu.memory_space<vmem>>, vector<8x256xf32>,
    %c240_i32_129 = arith.constant 240 : i32
    %234 = tpu.dynamic_rotate %192 by %c240_i32_129 dim 1 : vector<8x256xf32>, i32 -> vector<8x256xf32>
    %cst_130 = arith.constant 0.000000e+00 : f32
    %235 = vector.shape_cast %41 : vector<1x256xi1> to vector<1x256xi1>
    %236 = vector.broadcast %235 : vector<1x256xi1> to vector<8x256xi1>
    %237 = vector.broadcast %cst_130 : f32 to vector<8x256xf32>
    %238 = arith.select %236, %234, %237 : vector<8x256xi1>, vector<8x256xf32>
    %c56_131 = arith.constant 56 : index
    %c0_132 = arith.constant 0 : index
    %239 = vector.load %arg9[%c56_131, %c0_132] : memref<72x256xf32, #tpu.memory_space<vmem>>, vector<8x256xf32>
    tpu.vector_store %arg9[%c56_131, %c0_132], %238 {strides = array<i32>} : memref<72x256xf32, #tpu.memory_space<vmem>>, vector<8x256xf32>,
    %c239_i32_133 = arith.constant 239 : i32
    %240 = tpu.dynamic_rotate %192 by %c239_i32_133 dim 1 : vector<8x256xf32>, i32 -> vector<8x256xf32>
    %cst_134 = arith.constant 0.000000e+00 : f32
    %241 = vector.shape_cast %49 : vector<1x256xi1> to vector<1x256xi1>
    %242 = vector.broadcast %241 : vector<1x256xi1> to vector<8x256xi1>
    %243 = vector.broadcast %cst_134 : f32 to vector<8x256xf32>
    %244 = arith.select %242, %240, %243 : vector<8x256xi1>, vector<8x256xf32>
    %c64_135 = arith.constant 64 : index
    %c0_136 = arith.constant 0 : index
    %245 = vector.load %arg9[%c64_135, %c0_136] : memref<72x256xf32, #tpu.memory_space<vmem>>, vector<8x256xf32>
    tpu.vector_store %arg9[%c64_135, %c0_136], %244 {strides = array<i32>} : memref<72x256xf32, #tpu.memory_space<vmem>>, vector<8x256xf32>,
    %c0_137 = arith.constant 0 : index
    %c0_138 = arith.constant 0 : index
    %246 = vector.load %arg9[%c0_137, %c0_138] : memref<72x256xf32, #tpu.memory_space<vmem>>, vector<72x256xf32>
    %cst_139 = arith.constant dense<0.000000e+00> : vector<8x256xf32>
    %247 = tpu.matmul %194, %246, %cst_139 {dimension_numbers = #tpu.dot_dimension_numbers<[1], [0], [0], [1], [0, 0, 1, 1], [], []>} : vector<8x72xf32>, vector<72x256xf32>, vector<8x256xf32> -> vector<8x256xf32>
    %248 = vector.broadcast %196 : vector<8x1xf32> to vector<8x256xf32>
    %249 = arith.addf %247, %248 : vector<8x256xf32>
    %cst_140 = arith.constant 0.000000e+00 : f32
    %250 = vector.broadcast %cst_140 : f32 to vector<8x256xf32>
    %251 = arith.maximumf %249, %250 : vector<8x256xf32>
    %c255_i32_141 = arith.constant 255 : i32
    %252 = tpu.dynamic_rotate %251 by %c255_i32_141 dim 1 : vector<8x256xf32>, i32 -> vector<8x256xf32>
    %c1_i32_142 = arith.constant 1 : i32
    %253 = tpu.dynamic_rotate %251 by %c1_i32_142 dim 1 : vector<8x256xf32>, i32 -> vector<8x256xf32>
    %254 = vector.shape_cast %37 : vector<1x256xi1> to vector<1x256xi1>
    %255 = vector.broadcast %254 : vector<1x256xi1> to vector<8x256xi1>
    %256 = arith.select %255, %252, %253 : vector<8x256xi1>, vector<8x256xf32>
    %257 = arith.maximumf %251, %256 : vector<8x256xf32>
    %c240_i32_143 = arith.constant 240 : i32
    %258 = tpu.dynamic_rotate %257 by %c240_i32_143 dim 1 : vector<8x256xf32>, i32 -> vector<8x256xf32>
    %c16_i32_144 = arith.constant 16 : i32
    %259 = tpu.dynamic_rotate %257 by %c16_i32_144 dim 1 : vector<8x256xf32>, i32 -> vector<8x256xf32>
    %260 = vector.shape_cast %19 : vector<1x256xi1> to vector<1x256xi1>
    %261 = vector.broadcast %260 : vector<1x256xi1> to vector<8x256xi1>
    %262 = arith.select %261, %258, %259 : vector<8x256xi1>, vector<8x256xf32>
    %263 = arith.maximumf %257, %262 : vector<8x256xf32>
    %264 = arith.cmpf oeq, %251, %263 : vector<8x256xf32>
    %265 = arith.cmpf one, %256, %263 : vector<8x256xf32>
    %266 = vector.broadcast %37 : vector<1x256xi1> to vector<8x256xi1>
    %267 = arith.ori %266, %265 : vector<8x256xi1>
    %268 = arith.andi %264, %267 : vector<8x256xi1>
    %269 = arith.cmpf one, %262, %263 : vector<8x256xf32>
    %270 = vector.broadcast %19 : vector<1x256xi1> to vector<8x256xi1>
    %271 = arith.ori %270, %269 : vector<8x256xi1>
    %272 = arith.andi %268, %271 : vector<8x256xi1>
    %cst_145 = arith.constant 0.000000e+00 : f32
    %273 = vector.broadcast %cst_145 : f32 to vector<8x256xf32>
    %274 = arith.select %272, %251, %273 : vector<8x256xi1>, vector<8x256xf32>
    %c1_146 = arith.constant 1 : index
    %c0_147 = arith.constant 0 : index
    %c0_148 = arith.constant 0 : index
    %275 = vector.load %arg5[%c1_146, %c0_147, %c0_148] : memref<2x8x72xf32, #tpu.memory_space<vmem>>, vector<1x8x72xf32>
    %276 = vector.shape_cast %275 : vector<1x8x72xf32> to vector<8x72xf32>
    %c1_149 = arith.constant 1 : index
    %c0_150 = arith.constant 0 : index
    %c0_151 = arith.constant 0 : index
    %277 = vector.load %arg7[%c1_149, %c0_150, %c0_151] : memref<2x8x1xf32, #tpu.memory_space<vmem>>, vector<1x8x1xf32>
    %278 = vector.shape_cast %277 : vector<1x8x1xf32> to vector<8x1xf32>
    %c17_i32_152 = arith.constant 17 : i32
    %279 = tpu.dynamic_rotate %274 by %c17_i32_152 dim 1 : vector<8x256xf32>, i32 -> vector<8x256xf32>
    %cst_153 = arith.constant 0.000000e+00 : f32
    %280 = vector.shape_cast %46 : vector<1x256xi1> to vector<1x256xi1>
    %281 = vector.broadcast %280 : vector<1x256xi1> to vector<8x256xi1>
    %282 = vector.broadcast %cst_153 : f32 to vector<8x256xf32>
    %283 = arith.select %281, %279, %282 : vector<8x256xi1>, vector<8x256xf32>
    %c0_154 = arith.constant 0 : index
    %c0_155 = arith.constant 0 : index
    %284 = vector.load %arg9[%c0_154, %c0_155] : memref<72x256xf32, #tpu.memory_space<vmem>>, vector<8x256xf32>
    tpu.vector_store %arg9[%c0_154, %c0_155], %283 {strides = array<i32>} : memref<72x256xf32, #tpu.memory_space<vmem>>, vector<8x256xf32>,
    %c16_i32_156 = arith.constant 16 : i32
    %285 = tpu.dynamic_rotate %274 by %c16_i32_156 dim 1 : vector<8x256xf32>, i32 -> vector<8x256xf32>
    %cst_157 = arith.constant 0.000000e+00 : f32
    %286 = vector.shape_cast %39 : vector<1x256xi1> to vector<1x256xi1>
    %287 = vector.broadcast %286 : vector<1x256xi1> to vector<8x256xi1>
    %288 = vector.broadcast %cst_157 : f32 to vector<8x256xf32>
    %289 = arith.select %287, %285, %288 : vector<8x256xi1>, vector<8x256xf32>
    %c8_158 = arith.constant 8 : index
    %c0_159 = arith.constant 0 : index
    %290 = vector.load %arg9[%c8_158, %c0_159] : memref<72x256xf32, #tpu.memory_space<vmem>>, vector<8x256xf32>
    tpu.vector_store %arg9[%c8_158, %c0_159], %289 {strides = array<i32>} : memref<72x256xf32, #tpu.memory_space<vmem>>, vector<8x256xf32>,
    %c15_i32_160 = arith.constant 15 : i32
    %291 = tpu.dynamic_rotate %274 by %c15_i32_160 dim 1 : vector<8x256xf32>, i32 -> vector<8x256xf32>
    %cst_161 = arith.constant 0.000000e+00 : f32
    %292 = vector.shape_cast %47 : vector<1x256xi1> to vector<1x256xi1>
    %293 = vector.broadcast %292 : vector<1x256xi1> to vector<8x256xi1>
    %294 = vector.broadcast %cst_161 : f32 to vector<8x256xf32>
    %295 = arith.select %293, %291, %294 : vector<8x256xi1>, vector<8x256xf32>
    %c16_162 = arith.constant 16 : index
    %c0_163 = arith.constant 0 : index
    %296 = vector.load %arg9[%c16_162, %c0_163] : memref<72x256xf32, #tpu.memory_space<vmem>>, vector<8x256xf32>
    tpu.vector_store %arg9[%c16_162, %c0_163], %295 {strides = array<i32>} : memref<72x256xf32, #tpu.memory_space<vmem>>, vector<8x256xf32>,
    %c1_i32_164 = arith.constant 1 : i32
    %297 = tpu.dynamic_rotate %274 by %c1_i32_164 dim 1 : vector<8x256xf32>, i32 -> vector<8x256xf32>
    %cst_165 = arith.constant 0.000000e+00 : f32
    %298 = vector.shape_cast %43 : vector<1x256xi1> to vector<1x256xi1>
    %299 = vector.broadcast %298 : vector<1x256xi1> to vector<8x256xi1>
    %300 = vector.broadcast %cst_165 : f32 to vector<8x256xf32>
    %301 = arith.select %299, %297, %300 : vector<8x256xi1>, vector<8x256xf32>
    %c24_166 = arith.constant 24 : index
    %c0_167 = arith.constant 0 : index
    %302 = vector.load %arg9[%c24_166, %c0_167] : memref<72x256xf32, #tpu.memory_space<vmem>>, vector<8x256xf32>
    tpu.vector_store %arg9[%c24_166, %c0_167], %301 {strides = array<i32>} : memref<72x256xf32, #tpu.memory_space<vmem>>, vector<8x256xf32>,
    %c32_168 = arith.constant 32 : index
    %c0_169 = arith.constant 0 : index
    %303 = vector.load %arg9[%c32_168, %c0_169] : memref<72x256xf32, #tpu.memory_space<vmem>>, vector<8x256xf32>
    tpu.vector_store %arg9[%c32_168, %c0_169], %274 {strides = array<i32>} : memref<72x256xf32, #tpu.memory_space<vmem>>, vector<8x256xf32>,
    %c255_i32_170 = arith.constant 255 : i32
    %304 = tpu.dynamic_rotate %274 by %c255_i32_170 dim 1 : vector<8x256xf32>, i32 -> vector<8x256xf32>
    %cst_171 = arith.constant 0.000000e+00 : f32
    %305 = vector.shape_cast %45 : vector<1x256xi1> to vector<1x256xi1>
    %306 = vector.broadcast %305 : vector<1x256xi1> to vector<8x256xi1>
    %307 = vector.broadcast %cst_171 : f32 to vector<8x256xf32>
    %308 = arith.select %306, %304, %307 : vector<8x256xi1>, vector<8x256xf32>
    %c40_172 = arith.constant 40 : index
    %c0_173 = arith.constant 0 : index
    %309 = vector.load %arg9[%c40_172, %c0_173] : memref<72x256xf32, #tpu.memory_space<vmem>>, vector<8x256xf32>
    tpu.vector_store %arg9[%c40_172, %c0_173], %308 {strides = array<i32>} : memref<72x256xf32, #tpu.memory_space<vmem>>, vector<8x256xf32>,
    %c241_i32_174 = arith.constant 241 : i32
    %310 = tpu.dynamic_rotate %274 by %c241_i32_174 dim 1 : vector<8x256xf32>, i32 -> vector<8x256xf32>
    %cst_175 = arith.constant 0.000000e+00 : f32
    %311 = vector.shape_cast %48 : vector<1x256xi1> to vector<1x256xi1>
    %312 = vector.broadcast %311 : vector<1x256xi1> to vector<8x256xi1>
    %313 = vector.broadcast %cst_175 : f32 to vector<8x256xf32>
    %314 = arith.select %312, %310, %313 : vector<8x256xi1>, vector<8x256xf32>
    %c48_176 = arith.constant 48 : index
    %c0_177 = arith.constant 0 : index
    %315 = vector.load %arg9[%c48_176, %c0_177] : memref<72x256xf32, #tpu.memory_space<vmem>>, vector<8x256xf32>
    tpu.vector_store %arg9[%c48_176, %c0_177], %314 {strides = array<i32>} : memref<72x256xf32, #tpu.memory_space<vmem>>, vector<8x256xf32>,
    %c240_i32_178 = arith.constant 240 : i32
    %316 = tpu.dynamic_rotate %274 by %c240_i32_178 dim 1 : vector<8x256xf32>, i32 -> vector<8x256xf32>
    %cst_179 = arith.constant 0.000000e+00 : f32
    %317 = vector.shape_cast %41 : vector<1x256xi1> to vector<1x256xi1>
    %318 = vector.broadcast %317 : vector<1x256xi1> to vector<8x256xi1>
    %319 = vector.broadcast %cst_179 : f32 to vector<8x256xf32>
    %320 = arith.select %318, %316, %319 : vector<8x256xi1>, vector<8x256xf32>
    %c56_180 = arith.constant 56 : index
    %c0_181 = arith.constant 0 : index
    %321 = vector.load %arg9[%c56_180, %c0_181] : memref<72x256xf32, #tpu.memory_space<vmem>>, vector<8x256xf32>
    tpu.vector_store %arg9[%c56_180, %c0_181], %320 {strides = array<i32>} : memref<72x256xf32, #tpu.memory_space<vmem>>, vector<8x256xf32>,
    %c239_i32_182 = arith.constant 239 : i32
    %322 = tpu.dynamic_rotate %274 by %c239_i32_182 dim 1 : vector<8x256xf32>, i32 -> vector<8x256xf32>
    %cst_183 = arith.constant 0.000000e+00 : f32
    %323 = vector.shape_cast %49 : vector<1x256xi1> to vector<1x256xi1>
    %324 = vector.broadcast %323 : vector<1x256xi1> to vector<8x256xi1>
    %325 = vector.broadcast %cst_183 : f32 to vector<8x256xf32>
    %326 = arith.select %324, %322, %325 : vector<8x256xi1>, vector<8x256xf32>
    %c64_184 = arith.constant 64 : index
    %c0_185 = arith.constant 0 : index
    %327 = vector.load %arg9[%c64_184, %c0_185] : memref<72x256xf32, #tpu.memory_space<vmem>>, vector<8x256xf32>
    tpu.vector_store %arg9[%c64_184, %c0_185], %326 {strides = array<i32>} : memref<72x256xf32, #tpu.memory_space<vmem>>, vector<8x256xf32>,
    %c0_186 = arith.constant 0 : index
    %c0_187 = arith.constant 0 : index
    %328 = vector.load %arg9[%c0_186, %c0_187] : memref<72x256xf32, #tpu.memory_space<vmem>>, vector<72x256xf32>
    %cst_188 = arith.constant dense<0.000000e+00> : vector<8x256xf32>
    %329 = tpu.matmul %276, %328, %cst_188 {dimension_numbers = #tpu.dot_dimension_numbers<[1], [0], [0], [1], [0, 0, 1, 1], [], []>} : vector<8x72xf32>, vector<72x256xf32>, vector<8x256xf32> -> vector<8x256xf32>
    %330 = vector.broadcast %278 : vector<8x1xf32> to vector<8x256xf32>
    %331 = arith.addf %329, %330 : vector<8x256xf32>
    %cst_189 = arith.constant 0.000000e+00 : f32
    %332 = vector.broadcast %cst_189 : f32 to vector<8x256xf32>
    %333 = arith.maximumf %331, %332 : vector<8x256xf32>
    %c0_190 = arith.constant 0 : index
    %c0_191 = arith.constant 0 : index
    %c0_192 = arith.constant 0 : index
    %334 = vector.load %arg8[%c0_190, %c0_191, %c0_192] : memref<1x8x256xf32, #tpu.memory_space<vmem>>, vector<1x8x256xf32>
    %335 = vector.shape_cast %334 : vector<1x8x256xf32> to vector<8x256xf32>
    %336 = vector.shape_cast %333 : vector<8x256xf32> to vector<1x8x256xf32>
    tpu.vector_store %arg8[%c0_190, %c0_191, %c0_192], %336 {strides = array<i32>} : memref<1x8x256xf32, #tpu.memory_space<vmem>>, vector<1x8x256xf32>,
    return
  }
  func.func @transform_0(%arg0: i32) -> (i32, i32, i32) {
    %c0_i32 = arith.constant 0 : i32
    %c0_i32_0 = arith.constant 0 : i32
    %c0_i32_1 = arith.constant 0 : i32
    return %arg0, %c0_i32, %c0_i32_0 : i32, i32, i32
  }
  func.func @transform_1(%arg0: i32) -> (i32, i32) {
    %c0_i32 = arith.constant 0 : i32
    %c0_i32_0 = arith.constant 0 : i32
    %c0_i32_1 = arith.constant 0 : i32
    return %c0_i32, %c0_i32_0 : i32, i32
  }
  func.func @transform_2(%arg0: i32) -> (i32, i32) {
    %c0_i32 = arith.constant 0 : i32
    %c0_i32_0 = arith.constant 0 : i32
    %c0_i32_1 = arith.constant 0 : i32
    return %c0_i32, %c0_i32_0 : i32, i32
  }
  func.func @transform_3(%arg0: i32) -> (i32, i32, i32) {
    %c0_i32 = arith.constant 0 : i32
    %c0_i32_0 = arith.constant 0 : i32
    %c0_i32_1 = arith.constant 0 : i32
    %c0_i32_2 = arith.constant 0 : i32
    return %c0_i32, %c0_i32_0, %c0_i32_1 : i32, i32, i32
  }
  func.func @transform_4(%arg0: i32) -> (i32, i32, i32) {
    %c0_i32 = arith.constant 0 : i32
    %c0_i32_0 = arith.constant 0 : i32
    %c0_i32_1 = arith.constant 0 : i32
    %c0_i32_2 = arith.constant 0 : i32
    return %c0_i32, %c0_i32_0, %c0_i32_1 : i32, i32, i32
  }
  func.func @transform_5(%arg0: i32) -> (i32, i32, i32) {
    %c0_i32 = arith.constant 0 : i32
    %c0_i32_0 = arith.constant 0 : i32
    %c0_i32_1 = arith.constant 0 : i32
    %c0_i32_2 = arith.constant 0 : i32
    return %c0_i32, %c0_i32_0, %c0_i32_1 : i32, i32, i32
  }
  func.func @transform_6(%arg0: i32) -> (i32, i32, i32) {
    %c0_i32 = arith.constant 0 : i32
    %c0_i32_0 = arith.constant 0 : i32
    %c0_i32_1 = arith.constant 0 : i32
    %c0_i32_2 = arith.constant 0 : i32
    return %c0_i32, %c0_i32_0, %c0_i32_1 : i32, i32, i32
  }
  func.func @transform_7(%arg0: i32) -> (i32, i32, i32) {
    %c0_i32 = arith.constant 0 : i32
    %c0_i32_0 = arith.constant 0 : i32
    %c0_i32_1 = arith.constant 0 : i32
    return %arg0, %c0_i32, %c0_i32_0 : i32, i32, i32
  }
}

</mosaic_0001>

<llo_original>
// kernel: multi_cae_forward.1
$region0: #{multi_cae_forward.1}
  #allocation0 [shape = 'u32[]', space=smem, size = 0x4, offset = 0x4, fixed_abs, tag = 'smem constant byte address 0x4 - core index']
  #allocation1 [shape = 'u32[72,128]{1,0:T(1,128)}', space=vmem, size = 0x9000, scoped, tag = 'internal scratch']
  #allocation2 [shape = 'f32[72,256]{1,0:T(8,128)}', space=vmem, size = 0x12000, scoped, tag = 'scratch operand']
  %s0 = inlined_call_operand.vmem [shape: f32[2,8,256], index: 0, kind: input, shape index: {}]
  %s1 = inlined_call_operand.vmem [shape: s32[1,256], index: 1, kind: input, shape index: {}]
  %s2 = inlined_call_operand.vmem [shape: s32[1,256], index: 2, kind: input, shape index: {}]
  %s3 = inlined_call_operand.vmem [shape: f32[2,8,72], index: 3, kind: input, shape index: {}]
  %s4 = inlined_call_operand.vmem [shape: f32[2,8,72], index: 4, kind: input, shape index: {}]
  %s5 = inlined_call_operand.vmem [shape: f32[2,8,1], index: 5, kind: input, shape index: {}]
  %s6 = inlined_call_operand.vmem [shape: f32[2,8,1], index: 6, kind: input, shape index: {}]
  %s7 = inlined_call_operand.vmem [shape: f32[2,8,256], index: 7, kind: output, shape index: {}]
  %s8 = sld [smem:[#allocation0]]
  $region61: #{multi_cae_forward.1} parent=0
    _
  %s10 = ssub.s32 1, %s8
  %s11 = scalar_select 0, %s10, %s8
  loop: start=0, step=1, limit=4
  $region2: #{multi_cae_forward.1} parent=0 // loop_pre_header
    _
  $region3: #{multi_cae_forward.1} parent=0 // loop_header
    %s13 = sphi 0, %s17
    %p14 = scmp.ge.s32.totalorder %s13, 4
    %s23 = sphi 0, %s25
    %s26 = sphi 0, %s23
    %s27 = sphi 0, %s26
    %s43 = sphi 0, %s27
    %s47 = sphi 0, %s47
    %s49 = sphi 0, %s47
    %s50 = sphi 0, %s49
    %s64 = sphi 0, %s50
    %s68 = sphi 0, %s68
    %s70 = sphi 0, %s68
    %s71 = sphi 0, %s70
    %s85 = sphi 0, %s71
    %s89 = sphi 0, %s89
    %s91 = sphi 0, %s89
    %s92 = sphi 0, %s91
    %s106 = sphi 0, %s92
    %s110 = sphi 0, %s110
    %s112 = sphi 0, %s110
    %s113 = sphi 0, %s112
    %s127 = sphi 0, %s113
    %s131 = sphi 0, %s131
    %s133 = sphi 0, %s131
    %s134 = sphi 0, %s133
    %s148 = sphi 0, %s134
    %s152 = sphi 0, %s152
    %s154 = sphi 0, %s152
    %s155 = sphi 0, %s154
    %s169 = sphi 0, %s155
    %s175 = sphi 0, %s177
    %s178 = sphi 0, %s175
    %s179 = sphi 0, %s178
    %s195 = sphi 0, %s179
  $region4: #{multi_cae_forward.1} parent=0 // loop_header_branch
    %16 = sbr.rel (%p14) target = $region8
  $region5: #{multi_cae_forward.1} parent=0 // loop_body
    %s18 = ssub.s32 %s13, 1
    %s19 = ssub.s32 %s13, 2
    %s20 = sadd.s32 %s13, 1
    %s21 = ssub.s32 %s13, %s20
    %p22 = scmp.eq.s32.totalorder %s21, 0
    %s24 = sadd.s32 %s23, 1
    %s25 = scalar_select %p22, %s23, %s24
    %p28 = pneg %p22
    %p29 = scmp.eq.s32.totalorder %s13, 1
    %p30 = por %p28, %p29
    %p31 = scmp.ne.s32.totalorder %s23, %s26
    %p32 = scmp.eq.s32.totalorder %s13, 0
    %p33 = por %p31, %p32
    %p34 = scmp.ne.s32.totalorder %s23, %s26
    %p35 = scmp.eq.s32.totalorder %s18, 1
    %p36 = por %p34, %p35
    %p37 = scmp.ne.s32.totalorder %s26, %s27
    %p38 = scmp.eq.s32.totalorder %s18, 0
    %p39 = por %p37, %p38
    %p40 = scmp.ne.s32.totalorder %s26, %s27
    %p41 = scmp.eq.s32.totalorder %s19, 1
    %p42 = por %p40, %p41
    %p44 = scmp.ne.s32.totalorder %s27, %s43
    %p45 = scmp.eq.s32.totalorder %s19, 0
    %p46 = por %p44, %p45
    %s48 = sadd.s32 %s47, 1
    %p51 = scmp.eq.s32.totalorder %s13, 1
    %p52 = scmp.ne.s32.totalorder %s47, %s49
    %p53 = scmp.eq.s32.totalorder %s13, 0
    %p54 = por %p52, %p53
    %p55 = scmp.ne.s32.totalorder %s47, %s49
    %p56 = scmp.eq.s32.totalorder %s18, 1
    %p57 = por %p55, %p56
    %p58 = scmp.ne.s32.totalorder %s49, %s50
    %p59 = scmp.eq.s32.totalorder %s18, 0
    %p60 = por %p58, %p59
    %p61 = scmp.ne.s32.totalorder %s49, %s50
    %p62 = scmp.eq.s32.totalorder %s19, 1
    %p63 = por %p61, %p62
    %p65 = scmp.ne.s32.totalorder %s50, %s64
    %p66 = scmp.eq.s32.totalorder %s19, 0
    %p67 = por %p65, %p66
    %s69 = sadd.s32 %s68, 1
    %p72 = scmp.eq.s32.totalorder %s13, 1
    %p73 = scmp.ne.s32.totalorder %s68, %s70
    %p74 = scmp.eq.s32.totalorder %s13, 0
    %p75 = por %p73, %p74
    %p76 = scmp.ne.s32.totalorder %s68, %s70
    %p77 = scmp.eq.s32.totalorder %s18, 1
    %p78 = por %p76, %p77
    %p79 = scmp.ne.s32.totalorder %s70, %s71
    %p80 = scmp.eq.s32.totalorder %s18, 0
    %p81 = por %p79, %p80
    %p82 = scmp.ne.s32.totalorder %s70, %s71
    %p83 = scmp.eq.s32.totalorder %s19, 1
    %p84 = por %p82, %p83
    %p86 = scmp.ne.s32.totalorder %s71, %s85
    %p87 = scmp.eq.s32.totalorder %s19, 0
    %p88 = por %p86, %p87
    %s90 = sadd.s32 %s89, 1
    %p93 = scmp.eq.s32.totalorder %s13, 1
    %p94 = scmp.ne.s32.totalorder %s89, %s91
    %p95 = scmp.eq.s32.totalorder %s13, 0
    %p96 = por %p94, %p95
    %p97 = scmp.ne.s32.totalorder %s89, %s91
    %p98 = scmp.eq.s32.totalorder %s18, 1
    %p99 = por %p97, %p98
    %p100 = scmp.ne.s32.totalorder %s91, %s92
    %p101 = scmp.eq.s32.totalorder %s18, 0
    %p102 = por %p100, %p101
    %p103 = scmp.ne.s32.totalorder %s91, %s92
    %p104 = scmp.eq.s32.totalorder %s19, 1
    %p105 = por %p103, %p104
    %p107 = scmp.ne.s32.totalorder %s92, %s106
    %p108 = scmp.eq.s32.totalorder %s19, 0
    %p109 = por %p107, %p108
    %s111 = sadd.s32 %s110, 1
    %p114 = scmp.eq.s32.totalorder %s13, 1
    %p115 = scmp.ne.s32.totalorder %s110, %s112
    %p116 = scmp.eq.s32.totalorder %s13, 0
    %p117 = por %p115, %p116
    %p118 = scmp.ne.s32.totalorder %s110, %s112
    %p119 = scmp.eq.s32.totalorder %s18, 1
    %p120 = por %p118, %p119
    %p121 = scmp.ne.s32.totalorder %s112, %s113
    %p122 = scmp.eq.s32.totalorder %s18, 0
    %p123 = por %p121, %p122
    %p124 = scmp.ne.s32.totalorder %s112, %s113
    %p125 = scmp.eq.s32.totalorder %s19, 1
    %p126 = por %p124, %p125
    %p128 = scmp.ne.s32.totalorder %s113, %s127
    %p129 = scmp.eq.s32.totalorder %s19, 0
    %p130 = por %p128, %p129
    %s132 = sadd.s32 %s131, 1
    %p135 = scmp.eq.s32.totalorder %s13, 1
    %p136 = scmp.ne.s32.totalorder %s131, %s133
    %p137 = scmp.eq.s32.totalorder %s13, 0
    %p138 = por %p136, %p137
    %p139 = scmp.ne.s32.totalorder %s131, %s133
    %p140 = scmp.eq.s32.totalorder %s18, 1
    %p141 = por %p139, %p140
    %p142 = scmp.ne.s32.totalorder %s133, %s134
    %p143 = scmp.eq.s32.totalorder %s18, 0
    %p144 = por %p142, %p143
    %p145 = scmp.ne.s32.totalorder %s133, %s134
    %p146 = scmp.eq.s32.totalorder %s19, 1
    %p147 = por %p145, %p146
    %p149 = scmp.ne.s32.totalorder %s134, %s148
    %p150 = scmp.eq.s32.totalorder %s19, 0
    %p151 = por %p149, %p150
    %s153 = sadd.s32 %s152, 1
    %p156 = scmp.eq.s32.totalorder %s13, 1
    %p157 = scmp.ne.s32.totalorder %s152, %s154
    %p158 = scmp.eq.s32.totalorder %s13, 0
    %p159 = por %p157, %p158
    %p160 = scmp.ne.s32.totalorder %s152, %s154
    %p161 = scmp.eq.s32.totalorder %s18, 1
    %p162 = por %p160, %p161
    %p163 = scmp.ne.s32.totalorder %s154, %s155
    %p164 = scmp.eq.s32.totalorder %s18, 0
    %p165 = por %p163, %p164
    %p166 = scmp.ne.s32.totalorder %s154, %s155
    %p167 = scmp.eq.s32.totalorder %s19, 1
    %p168 = por %p166, %p167
    %p170 = scmp.ne.s32.totalorder %s155, %s169
    %p171 = scmp.eq.s32.totalorder %s19, 0
    %p172 = por %p170, %p171
    %s173 = ssub.s32 %s13, %s20
    %p174 = scmp.eq.s32.totalorder %s173, 0
    %s176 = sadd.s32 %s175, 1
    %s177 = scalar_select %p174, %s175, %s176
    %p180 = pneg %p174
    %p181 = scmp.eq.s32.totalorder %s13, 1
    %p182 = por %p180, %p181
    %p183 = scmp.ne.s32.totalorder %s175, %s178
    %p184 = scmp.eq.s32.totalorder %s13, 0
    %p185 = por %p183, %p184
    %p186 = scmp.ne.s32.totalorder %s175, %s178
    %p187 = scmp.eq.s32.totalorder %s18, 1
    %p188 = por %p186, %p187
    %p189 = scmp.ne.s32.totalorder %s178, %s179
    %p190 = scmp.eq.s32.totalorder %s18, 0
    %p191 = por %p189, %p190
    %p192 = scmp.ne.s32.totalorder %s178, %s179
    %p193 = scmp.eq.s32.totalorder %s19, 1
    %p194 = por %p192, %p193
    %p196 = scmp.ne.s32.totalorder %s179, %s195
    %p197 = scmp.eq.s32.totalorder %s19, 0
    %p198 = por %p196, %p197
    %p199 = scmp.le.s32.totalorder 1, %s13
    %p200 = scmp.lt.s32.totalorder %s13, 3
    %p201 = pnand %p199, %p200
    %p202 = pneg %p201
    // Predicated region
    $region9: #{multi_cae_forward.1} parent=5 // pred_check
      _
    $region10: #{multi_cae_forward.1} parent=5 // pred_check_branch
      %204 = sbr.rel (%p201) target = $region12
    $region11: #{multi_cae_forward.1} parent=5 // pred_region
      %s205 = ssub.s32 %s13, 1
      // Predicated region
      $region13: #{multi_cae_forward.1} parent=11 // pred_check
        %p206 = pneg %p60
      $region14: #{multi_cae_forward.1} parent=11 // pred_check_branch
        %208 = sbr.rel (%p206) target = $region16
      $region15: #{multi_cae_forward.1} parent=11 // pred_region
        _
      $region16: #{multi_cae_forward.1} parent=11 // pred_fallthru
        _
      // Predicated region
      $region17: #{multi_cae_forward.1} parent=11 // pred_check
        %p209 = pneg %p81
      $region18: #{multi_cae_forward.1} parent=11 // pred_check_branch
        %211 = sbr.rel (%p209) target = $region20
      $region19: #{multi_cae_forward.1} parent=11 // pred_region
        _
      $region20: #{multi_cae_forward.1} parent=11 // pred_fallthru
        _
      // Predicated region
      $region21: #{multi_cae_forward.1} parent=11 // pred_check
        %p212 = pneg %p102
      $region22: #{multi_cae_forward.1} parent=11 // pred_check_branch
        %214 = sbr.rel (%p212) target = $region24
      $region23: #{multi_cae_forward.1} parent=11 // pred_region
        _
      $region24: #{multi_cae_forward.1} parent=11 // pred_fallthru
        _
      // Predicated region
      $region25: #{multi_cae_forward.1} parent=11 // pred_check
        %p215 = pneg %p123
      $region26: #{multi_cae_forward.1} parent=11 // pred_check_branch
        %217 = sbr.rel (%p215) target = $region28
      $region27: #{multi_cae_forward.1} parent=11 // pred_region
        _
      $region28: #{multi_cae_forward.1} parent=11 // pred_fallthru
        _
      // Predicated region
      $region29: #{multi_cae_forward.1} parent=11 // pred_check
        %p218 = pneg %p144
      $region30: #{multi_cae_forward.1} parent=11 // pred_check_branch
        %220 = sbr.rel (%p218) target = $region32
      $region31: #{multi_cae_forward.1} parent=11 // pred_region
        _
      $region32: #{multi_cae_forward.1} parent=11 // pred_fallthru
        _
      // Predicated region
      $region33: #{multi_cae_forward.1} parent=11 // pred_check
        %p221 = pneg %p165
      $region34: #{multi_cae_forward.1} parent=11 // pred_check_branch
        %223 = sbr.rel (%p221) target = $region36
      $region35: #{multi_cae_forward.1} parent=11 // pred_region
        _
      $region36: #{multi_cae_forward.1} parent=11 // pred_fallthru
        _
    $region12: #{multi_cae_forward.1} parent=5 // pred_fallthru
      _
    %p224 = scmp.lt.s32.totalorder %s13, 2
    // Predicated region
    $region37: #{multi_cae_forward.1} parent=5 // pred_check
      %p225 = pneg %p224
    $region38: #{multi_cae_forward.1} parent=5 // pred_check_branch
      %227 = sbr.rel (%p225) target = $region40
    $region39: #{multi_cae_forward.1} parent=5 // pred_region
      // Predicated region
      $region41: #{multi_cae_forward.1} parent=39 // pred_check
        %p228 = pneg %p33
      $region42: #{multi_cae_forward.1} parent=39 // pred_check_branch
        %230 = sbr.rel (%p228) target = $region44
      $region43: #{multi_cae_forward.1} parent=39 // pred_region
        %p231 = scmp.lt.s32.totalorder %s13, 1
        %s232 = scalar_select %p231, %s13, 1
        %s233 = smul.addr %s232, 2
        %s234 = smul.addr %s233, 8
        %s235 = scalar_lea.vmem %s0, %s234
      $region44: #{multi_cae_forward.1} parent=39 // pred_fallthru
        _
    $region40: #{multi_cae_forward.1} parent=5 // pred_fallthru
      _
    %p236 = scmp.le.s32.totalorder 1, %s13
    %p237 = scmp.lt.s32.totalorder %s13, 3
    %p238 = pnand %p236, %p237
    %p239 = pneg %p238
    // Predicated region
    $region45: #{multi_cae_forward.1} parent=5 // pred_check
      _
    $region46: #{multi_cae_forward.1} parent=5 // pred_check_branch
      %241 = sbr.rel (%p238) target = $region48
    $region47: #{multi_cae_forward.1} parent=5 // pred_region
      %s242 = ssub.s32 %s13, 1
      %p243 = scmp.lt.s32.totalorder %s18, 1
      %s244 = scalar_select %p243, %s18, 1
      %s245 = smul.addr %s244, 2
      %s246 = smul.addr %s245, 8
      %s247 = scalar_lea.vmem %s0, %s246
      %p248 = pneg %p39
      %p249 = pneg %p36
      %p250 = pneg %p60
      %p251 = pneg %p57
      %p252 = pneg %p81
      %p253 = pneg %p78
      %p254 = pneg %p102
      %p255 = pneg %p99
      %p256 = pneg %p123
      %p257 = pneg %p120
      %p258 = pneg %p144
      %p259 = pneg %p141
      %p260 = pneg %p165
      %p261 = pneg %p162
      %p262 = pneg %p191
      %p263 = pneg %p188
      %p264 = scmp.lt.s32.totalorder %s18, 1
      %s265 = scalar_select %p264, %s18, 1
      %s266 = smul.addr %s265, 2
      %s267 = smul.addr %s266, 8
      %s268 = scalar_lea.vmem %s7, %s267
      %p269 = scmp.lt.s32.totalorder %s18, 1
      %s270 = scalar_select %p269, %s18, 1
      %s271 = smul.addr %s270, 2
      %s272 = smul.addr %s271, 8
      %s273 = scalar_lea.vmem %s0, %s272
      %p274 = scmp.lt.s32.totalorder %s18, 1
      %s275 = scalar_select %p274, %s18, 1
      %s276 = smul.addr %s275, 2
      %s277 = smul.addr %s276, 8
      %s278 = scalar_lea.vmem %s7, %s277
      %v279 = vld [vmem:[%s1] sm:$0x3]
      %v280 = vld [vmem:[%s2] sm:$0x3]
      %vm281 = vcmp.lt.s32.totalorder %v279, 0
      %v282 = vsub.s32 0, %v279
      %v283 = vsel %vm281, %v282, %v279
      %v284 = vshrl.u32 %v283, 1
      %v285 = vand.u32 %v283, 1
      %v286 = vsub.s32 0, %v285
      %v287 = vsel %vm281, %v286, %v285
      %vm288 = vcmp.ne.s32.totalorder %v287, 0
      %vm289 = vcmp.lt.s32.totalorder %v287, 0
      %vm290 = vmand %vm289, %vm288
      %v291 = vadd.s32 %v287, 2
      %v292 = vsel %vm290, %v291, %v287
      %vm293 = vcmp.eq.s32.totalorder %v292, 0
      %vm294 = vcmp.lt.s32.totalorder %v280, 0
      %v295 = vsub.s32 0, %v280
      %v296 = vsel %vm294, %v295, %v280
      %v297 = vshrl.u32 %v296, 1
      %v298 = vand.u32 %v296, 1
      %v299 = vsub.s32 0, %v298
      %v300 = vsel %vm294, %v299, %v298
      %vm301 = vcmp.ne.s32.totalorder %v300, 0
      %vm302 = vcmp.lt.s32.totalorder %v300, 0
      %vm303 = vmand %vm302, %vm301
      %v304 = vadd.s32 %v300, 2
      %v305 = vsel %vm303, %v304, %v300
      %vm306 = vcmp.eq.s32.totalorder %v305, 0
      %vm307 = vcmp.ge.s32.totalorder %v279, 1
      %vm308 = vcmp.lt.s32.totalorder %v279, 15
      %vm309 = vcmp.ge.s32.totalorder %v280, 1
      %vm310 = vcmp.lt.s32.totalorder %v280, 15
      %vm311 = vmand %vm307, %vm309
      %vm312 = vmand %vm307, %vm310
      %vm313 = vmand %vm308, %vm309
      %vm314 = vmand %vm308, %vm310
      %v315 = vld [vmem:[%s273] sm:$0xff]
      %v316 = vld [vmem:[%s273 + $0x8] sm:$0xff]
      %v317 = vld [vmem:[%s3] sm:$0xff]
      %v318 = vld [vmem:[%s5] sm:$0xff]
      %319 = vrot.lane.b32.xlu0 %v315, 17
      %v320 = vpop.permute.xlu0 %319
      %321 = vrot.lane.b32.xlu0 %v316, 17
      %v322 = vpop.permute.xlu0 %321
      %v323 = vlaneseq
      %v324 = vand.u32 %v323, 127
      %vm325 = vcmp.lt.s32.totalorder %v324, 17
      %v326 = vsel %vm325, %v320, %v322
      %v327 = vsel %vm325, %v322, %v320
      %v328 = vsel %vm311, 1, 0
      %v329 = vperm.slane %v328, 0
      %v330 = vperm.slane %v328, 1
      %vm331 = vcmp.eq.s32.totalorder %v329, 1
      %vm332 = vcmp.eq.s32.totalorder %v330, 1
      %v333 = vsel %vm331, %v327, 0.0
      %v334 = vsel %vm332, %v326, 0.0
      %335 = vst [vmem:[#allocation2] sm:$0xff] %v333
      %336 = vst [vmem:[#allocation2 + $0x8] sm:$0xff] %v334
      %337 = vrot.lane.b32.xlu0 %v315, 16
      %v338 = vpop.permute.xlu0 %337
      %339 = vrot.lane.b32.xlu0 %v316, 16
      %v340 = vpop.permute.xlu0 %339
      %vm341 = vcmp.lt.s32.totalorder %v324, 16
      %v342 = vsel %vm341, %v338, %v340
      %v343 = vsel %vm341, %v340, %v338
      %v344 = vsel %vm307, 1, 0
      %v345 = vperm.slane %v344, 0
      %v346 = vperm.slane %v344, 1
      %vm347 = vcmp.eq.s32.totalorder %v345, 1
      %vm348 = vcmp.eq.s32.totalorder %v346, 1
      %v349 = vsel %vm347, %v343, 0.0
      %v350 = vsel %vm348, %v342, 0.0
      %351 = vst [vmem:[#allocation2 + $0x10] sm:$0xff] %v349
      %352 = vst [vmem:[#allocation2 + $0x18] sm:$0xff] %v350
      %353 = vrot.lane.b32.xlu0 %v315, 15
      %v354 = vpop.permute.xlu0 %353
      %355 = vrot.lane.b32.xlu0 %v316, 15
      %v356 = vpop.permute.xlu0 %355
      %vm357 = vcmp.lt.s32.totalorder %v324, 15
      %v358 = vsel %vm357, %v354, %v356
      %v359 = vsel %vm357, %v356, %v354
      %v360 = vsel %vm312, 1, 0
      %v361 = vperm.slane %v360, 0
      %v362 = vperm.slane %v360, 1
      %vm363 = vcmp.eq.s32.totalorder %v361, 1
      %vm364 = vcmp.eq.s32.totalorder %v362, 1
      %v365 = vsel %vm363, %v359, 0.0
      %v366 = vsel %vm364, %v358, 0.0
      %367 = vst [vmem:[#allocation2 + $0x20] sm:$0xff] %v365
      %368 = vst [vmem:[#allocation2 + $0x28] sm:$0xff] %v366
      %369 = vrot.lane.b32.xlu0 %v315, 1
      %v370 = vpop.permute.xlu0 %369
      %371 = vrot.lane.b32.xlu0 %v316, 1
      %v372 = vpop.permute.xlu0 %371
      %vm373 = vcmp.lt.s32.totalorder %v324, 1
      %v374 = vsel %vm373, %v370, %v372
      %v375 = vsel %vm373, %v372, %v370
      %v376 = vsel %vm309, 1, 0
      %v377 = vperm.slane %v376, 0
      %v378 = vperm.slane %v376, 1
      %vm379 = vcmp.eq.s32.totalorder %v377, 1
      %vm380 = vcmp.eq.s32.totalorder %v378, 1
      %v381 = vsel %vm379, %v375, 0.0
      %v382 = vsel %vm380, %v374, 0.0
      %383 = vst [vmem:[#allocation2 + $0x30] sm:$0xff] %v381
      %384 = vst [vmem:[#allocation2 + $0x38] sm:$0xff] %v382
      %385 = vst [vmem:[#allocation2 + $0x40] sm:$0xff] %v315
      %386 = vst [vmem:[#allocation2 + $0x48] sm:$0xff] %v316
      %387 = vrot.lane.b32.xlu0 %v315, 127
      %v388 = vpop.permute.xlu0 %387
      %389 = vrot.lane.b32.xlu0 %v316, 127
      %v390 = vpop.permute.xlu0 %389
      %vm391 = vcmp.lt.s32.totalorder %v324, 127
      %v392 = vsel %vm391, %v388, %v390
      %v393 = vsel %vm391, %v390, %v388
      %v394 = vsel %vm310, 1, 0
      %v395 = vperm.slane %v394, 0
      %v396 = vperm.slane %v394, 1
      %vm397 = vcmp.eq.s32.totalorder %v395, 1
      %vm398 = vcmp.eq.s32.totalorder %v396, 1
      %v399 = vsel %vm397, %v392, 0.0
      %v400 = vsel %vm398, %v393, 0.0
      %401 = vst [vmem:[#allocation2 + $0x50] sm:$0xff] %v399
      %402 = vst [vmem:[#allocation2 + $0x58] sm:$0xff] %v400
      %403 = vrot.lane.b32.xlu0 %v315, 113
      %v404 = vpop.permute.xlu0 %403
      %405 = vrot.lane.b32.xlu0 %v316, 113
      %v406 = vpop.permute.xlu0 %405
      %vm407 = vcmp.lt.s32.totalorder %v324, 113
      %v408 = vsel %vm407, %v404, %v406
      %v409 = vsel %vm407, %v406, %v404
      %v410 = vsel %vm313, 1, 0
      %v411 = vperm.slane %v410, 0
      %v412 = vperm.slane %v410, 1
      %vm413 = vcmp.eq.s32.totalorder %v411, 1
      %vm414 = vcmp.eq.s32.totalorder %v412, 1
      %v415 = vsel %vm413, %v408, 0.0
      %v416 = vsel %vm414, %v409, 0.0
      %417 = vst [vmem:[#allocation2 + $0x60] sm:$0xff] %v415
      %418 = vst [vmem:[#allocation2 + $0x68] sm:$0xff] %v416
      %419 = vrot.lane.b32.xlu0 %v315, 112
      %v420 = vpop.permute.xlu0 %419
      %421 = vrot.lane.b32.xlu0 %v316, 112
      %v422 = vpop.permute.xlu0 %421
      %vm423 = vcmp.lt.s32.totalorder %v324, 112
      %v424 = vsel %vm423, %v420, %v422
      %v425 = vsel %vm423, %v422, %v420
      %v426 = vsel %vm308, 1, 0
      %v427 = vperm.slane %v426, 0
      %v428 = vperm.slane %v426, 1
      %vm429 = vcmp.eq.s32.totalorder %v427, 1
      %vm430 = vcmp.eq.s32.totalorder %v428, 1
      %v431 = vsel %vm429, %v424, 0.0
      %v432 = vsel %vm430, %v425, 0.0
      %433 = vst [vmem:[#allocation2 + $0x70] sm:$0xff] %v431
      %434 = vst [vmem:[#allocation2 + $0x78] sm:$0xff] %v432
      %435 = vrot.lane.b32.xlu0 %v315, 111
      %v436 = vpop.permute.xlu0 %435
      %437 = vrot.lane.b32.xlu0 %v316, 111
      %v438 = vpop.permute.xlu0 %437
      %vm439 = vcmp.lt.s32.totalorder %v324, 111
      %v440 = vsel %vm439, %v436, %v438
      %v441 = vsel %vm439, %v438, %v436
      %v442 = vsel %vm314, 1, 0
      %v443 = vperm.slane %v442, 0
      %v444 = vperm.slane %v442, 1
      %vm445 = vcmp.eq.s32.totalorder %v443, 1
      %vm446 = vcmp.eq.s32.totalorder %v444, 1
      %v447 = vsel %vm445, %v440, 0.0
      %v448 = vsel %vm446, %v441, 0.0
      %449 = vst [vmem:[#allocation2 + $0x80] sm:$0xff] %v447
      %450 = vst [vmem:[#allocation2 + $0x88] sm:$0xff] %v448
      %v451 = vld [vmem:[#allocation2] sm:$0xff]
      %v452 = vld [vmem:[#allocation2 + $0x8] sm:$0xff]
      %v453 = vld [vmem:[#allocation2 + $0x10] sm:$0xff]
      %v454 = vld [vmem:[#allocation2 + $0x18] sm:$0xff]
      %v455 = vld [vmem:[#allocation2 + $0x20] sm:$0xff]
      %v456 = vld [vmem:[#allocation2 + $0x28] sm:$0xff]
      %v457 = vld [vmem:[#allocation2 + $0x30] sm:$0xff]
      %v458 = vld [vmem:[#allocation2 + $0x38] sm:$0xff]
      %v459 = vld [vmem:[#allocation2 + $0x40] sm:$0xff]
      %v460 = vld [vmem:[#allocation2 + $0x48] sm:$0xff]
      %v461 = vld [vmem:[#allocation2 + $0x50] sm:$0xff]
      %v462 = vld [vmem:[#allocation2 + $0x58] sm:$0xff]
      %v463 = vld [vmem:[#allocation2 + $0x60] sm:$0xff]
      %v464 = vld [vmem:[#allocation2 + $0x68] sm:$0xff]
      %v465 = vld [vmem:[#allocation2 + $0x70] sm:$0xff]
      %v466 = vld [vmem:[#allocation2 + $0x78] sm:$0xff]
      %v467 = vld [vmem:[#allocation2 + $0x80] sm:$0xff]
      %v468 = vld [vmem:[#allocation2 + $0x88] sm:$0xff]
      %470 = vset.pattern.permute.xlu0 0
      %471 = vperm.xlu0 %470, %v318
      %v472 = vpop.permute.xlu0 %471
      %vm474 = vcmask 588800
      %v476 = vsel %vm474, %v317, 0
      %478 = vmatpush.msra.mxu0 0.0
      %479 = vmatpush.msra.mxu0 0.0
      %480 = vmatpush.msra.mxu0 0.0
      %481 = vmatpush.msra.mxu0 0.0
      %482 = vmatpush.msra.mxu0 0.0
      %483 = vmatpush.msra.mxu0 0.0
      %484 = vmatpush.msra.mxu0 0.0
      %485 = vmatpush.msra.mxu0 %v467
      %486 = vmatpush.msra.mxu0 %v465
      %487 = vmatpush.msra.mxu0 %v463
      %488 = vmatpush.msra.mxu0 %v461
      %489 = vmatpush.msra.mxu0 %v459
      %490 = vmatpush.msra.mxu0 %v457
      %491 = vmatpush.msra.mxu0 %v455
      %492 = vmatpush.msra.mxu0 %v453
      %493 = vmatpush.msra.mxu0 %v451
      %494 = vmatmul.f32.gmra.mxu0 %v476
      %v495 = vpop.f32.mrf.mxu0
      %v496 = vadd.f32 %v472, %v495
      %497 = vdwg.mxu0
      %498 = vmatpush.msra.mxu0 0.0
      %499 = vmatpush.msra.mxu0 0.0
      %500 = vmatpush.msra.mxu0 0.0
      %501 = vmatpush.msra.mxu0 0.0
      %502 = vmatpush.msra.mxu0 0.0
      %503 = vmatpush.msra.mxu0 0.0
      %504 = vmatpush.msra.mxu0 0.0
      %505 = vmatpush.msra.mxu0 %v468
      %506 = vmatpush.msra.mxu0 %v466
      %507 = vmatpush.msra.mxu0 %v464
      %508 = vmatpush.msra.mxu0 %v462
      %509 = vmatpush.msra.mxu0 %v460
      %510 = vmatpush.msra.mxu0 %v458
      %511 = vmatpush.msra.mxu0 %v456
      %512 = vmatpush.msra.mxu0 %v454
      %513 = vmatpush.msra.mxu0 %v452
      %514 = vmatmul.f32.gmra.mxu0 %v476
      %v515 = vpop.f32.mrf.mxu0
      %v516 = vadd.f32 %v472, %v515
      %517 = vdwg.mxu0
      %v518 = vmax.f32 %v496, 0.0
      %v519 = vmax.f32 %v516, 0.0
      %520 = vrot.lane.b32.xlu0 %v518, 127
      %v521 = vpop.permute.xlu0 %520
      %522 = vrot.lane.b32.xlu0 %v519, 127
      %v523 = vpop.permute.xlu0 %522
      %v524 = vsel %vm391, %v521, %v523
      %v525 = vsel %vm391, %v523, %v521
      %526 = vrot.lane.b32.xlu0 %v518, 1
      %v527 = vpop.permute.xlu0 %526
      %528 = vrot.lane.b32.xlu0 %v519, 1
      %v529 = vpop.permute.xlu0 %528
      %v530 = vsel %vm373, %v527, %v529
      %v531 = vsel %vm373, %v529, %v527
      %v532 = vsel %vm306, 1, 0
      %v533 = vperm.slane %v532, 0
      %v534 = vperm.slane %v532, 1
      %vm535 = vcmp.eq.s32.totalorder %v533, 1
      %vm536 = vcmp.eq.s32.totalorder %v534, 1
      %v537 = vsel %vm535, %v524, %v531
      %v538 = vsel %vm536, %v525, %v530
      %v539 = vmax.f32 %v518, %v537
      %v540 = vmax.f32 %v519, %v538
      %541 = vrot.lane.b32.xlu0 %v539, 112
      %v542 = vpop.permute.xlu0 %541
      %543 = vrot.lane.b32.xlu0 %v540, 112
      %v544 = vpop.permute.xlu0 %543
      %v545 = vsel %vm423, %v542, %v544
      %v546 = vsel %vm423, %v544, %v542
      %547 = vrot.lane.b32.xlu0 %v539, 16
      %v548 = vpop.permute.xlu0 %547
      %549 = vrot.lane.b32.xlu0 %v540, 16
      %v550 = vpop.permute.xlu0 %549
      %v551 = vsel %vm341, %v548, %v550
      %v552 = vsel %vm341, %v550, %v548
      %v553 = vsel %vm293, 1, 0
      %v554 = vperm.slane %v553, 0
      %v555 = vperm.slane %v553, 1
      %vm556 = vcmp.eq.s32.totalorder %v554, 1
      %vm557 = vcmp.eq.s32.totalorder %v555, 1
      %v558 = vsel %vm556, %v545, %v552
      %v559 = vsel %vm557, %v546, %v551
      %v560 = vmax.f32 %v539, %v558
      %v561 = vmax.f32 %v540, %v559
      %vm562 = vcmp.eq.f32.partialorder %v518, %v560
      %vm563 = vcmp.eq.f32.partialorder %v519, %v561
      %vm564 = vcmp.ne.f32.partialorder %v537, %v560
      %vm565 = vcmp.ne.f32.partialorder %v538, %v561
      %vm566 = vmor %vm535, %vm564
      %vm567 = vmor %vm536, %vm565
      %vm568 = vmand %vm562, %vm566
      %vm569 = vmand %vm563, %vm567
      %vm570 = vcmp.ne.f32.partialorder %v558, %v560
      %vm571 = vcmp.ne.f32.partialorder %v559, %v561
      %vm572 = vmor %vm556, %vm570
      %vm573 = vmor %vm557, %vm571
      %vm574 = vmand %vm568, %vm572
      %vm575 = vmand %vm569, %vm573
      %v576 = vsel %vm574, %v518, 0.0
      %v577 = vsel %vm575, %v519, 0.0
      %v578 = vld [vmem:[%s4] sm:$0xff]
      %v579 = vld [vmem:[%s6] sm:$0xff]
      %580 = vrot.lane.b32.xlu0 %v576, 17
      %v581 = vpop.permute.xlu0 %580
      %582 = vrot.lane.b32.xlu0 %v577, 17
      %v583 = vpop.permute.xlu0 %582
      %v584 = vsel %vm325, %v581, %v583
      %v585 = vsel %vm325, %v583, %v581
      %v586 = vsel %vm331, %v585, 0.0
      %v587 = vsel %vm332, %v584, 0.0
      %588 = vst [vmem:[#allocation2] sm:$0xff] %v586
      %589 = vst [vmem:[#allocation2 + $0x8] sm:$0xff] %v587
      %590 = vrot.lane.b32.xlu0 %v576, 16
      %v591 = vpop.permute.xlu0 %590
      %592 = vrot.lane.b32.xlu0 %v577, 16
      %v593 = vpop.permute.xlu0 %592
      %v594 = vsel %vm341, %v591, %v593
      %v595 = vsel %vm341, %v593, %v591
      %v596 = vsel %vm347, %v595, 0.0
      %v597 = vsel %vm348, %v594, 0.0
      %598 = vst [vmem:[#allocation2 + $0x10] sm:$0xff] %v596
      %599 = vst [vmem:[#allocation2 + $0x18] sm:$0xff] %v597
      %600 = vrot.lane.b32.xlu0 %v576, 15
      %v601 = vpop.permute.xlu0 %600
      %602 = vrot.lane.b32.xlu0 %v577, 15
      %v603 = vpop.permute.xlu0 %602
      %v604 = vsel %vm357, %v601, %v603
      %v605 = vsel %vm357, %v603, %v601
      %v606 = vsel %vm363, %v605, 0.0
      %v607 = vsel %vm364, %v604, 0.0
      %608 = vst [vmem:[#allocation2 + $0x20] sm:$0xff] %v606
      %609 = vst [vmem:[#allocation2 + $0x28] sm:$0xff] %v607
      %610 = vrot.lane.b32.xlu0 %v576, 1
      %v611 = vpop.permute.xlu0 %610
      %612 = vrot.lane.b32.xlu0 %v577, 1
      %v613 = vpop.permute.xlu0 %612
      %v614 = vsel %vm373, %v611, %v613
      %v615 = vsel %vm373, %v613, %v611
      %v616 = vsel %vm379, %v615, 0.0
      %v617 = vsel %vm380, %v614, 0.0
      %618 = vst [vmem:[#allocation2 + $0x30] sm:$0xff] %v616
      %619 = vst [vmem:[#allocation2 + $0x38] sm:$0xff] %v617
      %620 = vst [vmem:[#allocation2 + $0x40] sm:$0xff] %v576
      %621 = vst [vmem:[#allocation2 + $0x48] sm:$0xff] %v577
      %622 = vrot.lane.b32.xlu0 %v576, 127
      %v623 = vpop.permute.xlu0 %622
      %624 = vrot.lane.b32.xlu0 %v577, 127
      %v625 = vpop.permute.xlu0 %624
      %v626 = vsel %vm391, %v623, %v625
      %v627 = vsel %vm391, %v625, %v623
      %v628 = vsel %vm397, %v626, 0.0
      %v629 = vsel %vm398, %v627, 0.0
      %630 = vst [vmem:[#allocation2 + $0x50] sm:$0xff] %v628
      %631 = vst [vmem:[#allocation2 + $0x58] sm:$0xff] %v629
      %632 = vrot.lane.b32.xlu0 %v576, 113
      %v633 = vpop.permute.xlu0 %632
      %634 = vrot.lane.b32.xlu0 %v577, 113
      %v635 = vpop.permute.xlu0 %634
      %v636 = vsel %vm407, %v633, %v635
      %v637 = vsel %vm407, %v635, %v633
      %v638 = vsel %vm413, %v636, 0.0
      %v639 = vsel %vm414, %v637, 0.0
      %640 = vst [vmem:[#allocation2 + $0x60] sm:$0xff] %v638
      %641 = vst [vmem:[#allocation2 + $0x68] sm:$0xff] %v639
      %642 = vrot.lane.b32.xlu0 %v576, 112
      %v643 = vpop.permute.xlu0 %642
      %644 = vrot.lane.b32.xlu0 %v577, 112
      %v645 = vpop.permute.xlu0 %644
      %v646 = vsel %vm423, %v643, %v645
      %v647 = vsel %vm423, %v645, %v643
      %v648 = vsel %vm429, %v646, 0.0
      %v649 = vsel %vm430, %v647, 0.0
      %650 = vst [vmem:[#allocation2 + $0x70] sm:$0xff] %v648
      %651 = vst [vmem:[#allocation2 + $0x78] sm:$0xff] %v649
      %652 = vrot.lane.b32.xlu0 %v576, 111
      %v653 = vpop.permute.xlu0 %652
      %654 = vrot.lane.b32.xlu0 %v577, 111
      %v655 = vpop.permute.xlu0 %654
      %v656 = vsel %vm439, %v653, %v655
      %v657 = vsel %vm439, %v655, %v653
      %v658 = vsel %vm445, %v656, 0.0
      %v659 = vsel %vm446, %v657, 0.0
      %660 = vst [vmem:[#allocation2 + $0x80] sm:$0xff] %v658
      %661 = vst [vmem:[#allocation2 + $0x88] sm:$0xff] %v659
      %v662 = vld [vmem:[#allocation2] sm:$0xff]
      %v663 = vld [vmem:[#allocation2 + $0x8] sm:$0xff]
      %v664 = vld [vmem:[#allocation2 + $0x10] sm:$0xff]
      %v665 = vld [vmem:[#allocation2 + $0x18] sm:$0xff]
      %v666 = vld [vmem:[#allocation2 + $0x20] sm:$0xff]
      %v667 = vld [vmem:[#allocation2 + $0x28] sm:$0xff]
      %v668 = vld [vmem:[#allocation2 + $0x30] sm:$0xff]
      %v669 = vld [vmem:[#allocation2 + $0x38] sm:$0xff]
      %v670 = vld [vmem:[#allocation2 + $0x40] sm:$0xff]
      %v671 = vld [vmem:[#allocation2 + $0x48] sm:$0xff]
      %v672 = vld [vmem:[#allocation2 + $0x50] sm:$0xff]
      %v673 = vld [vmem:[#allocation2 + $0x58] sm:$0xff]
      %v674 = vld [vmem:[#allocation2 + $0x60] sm:$0xff]
      %v675 = vld [vmem:[#allocation2 + $0x68] sm:$0xff]
      %v676 = vld [vmem:[#allocation2 + $0x70] sm:$0xff]
      %v677 = vld [vmem:[#allocation2 + $0x78] sm:$0xff]
      %v678 = vld [vmem:[#allocation2 + $0x80] sm:$0xff]
      %v679 = vld [vmem:[#allocation2 + $0x88] sm:$0xff]
      %681 = vset.pattern.permute.xlu0 0
      %682 = vperm.xlu0 %681, %v579
      %v683 = vpop.permute.xlu0 %682
      %v686 = vsel %vm474, %v578, 0
      %688 = vmatpush.msra.mxu0 0.0
      %689 = vmatpush.msra.mxu0 0.0
      %690 = vmatpush.msra.mxu0 0.0
      %691 = vmatpush.msra.mxu0 0.0
      %692 = vmatpush.msra.mxu0 0.0
      %693 = vmatpush.msra.mxu0 0.0
      %694 = vmatpush.msra.mxu0 0.0
      %695 = vmatpush.msra.mxu0 %v678
      %696 = vmatpush.msra.mxu0 %v676
      %697 = vmatpush.msra.mxu0 %v674
      %698 = vmatpush.msra.mxu0 %v672
      %699 = vmatpush.msra.mxu0 %v670
      %700 = vmatpush.msra.mxu0 %v668
      %701 = vmatpush.msra.mxu0 %v666
      %702 = vmatpush.msra.mxu0 %v664
      %703 = vmatpush.msra.mxu0 %v662
      %704 = vmatmul.f32.gmra.mxu0 %v686
      %v705 = vpop.f32.mrf.mxu0
      %v706 = vadd.f32 %v683, %v705
      %707 = vdwg.mxu0
      %708 = vmatpush.msra.mxu0 0.0
      %709 = vmatpush.msra.mxu0 0.0
      %710 = vmatpush.msra.mxu0 0.0
      %711 = vmatpush.msra.mxu0 0.0
      %712 = vmatpush.msra.mxu0 0.0
      %713 = vmatpush.msra.mxu0 0.0
      %714 = vmatpush.msra.mxu0 0.0
      %715 = vmatpush.msra.mxu0 %v679
      %716 = vmatpush.msra.mxu0 %v677
      %717 = vmatpush.msra.mxu0 %v675
      %718 = vmatpush.msra.mxu0 %v673
      %719 = vmatpush.msra.mxu0 %v671
      %720 = vmatpush.msra.mxu0 %v669
      %721 = vmatpush.msra.mxu0 %v667
      %722 = vmatpush.msra.mxu0 %v665
      %723 = vmatpush.msra.mxu0 %v663
      %724 = vmatmul.f32.gmra.mxu0 %v686
      %v725 = vpop.f32.mrf.mxu0
      %v726 = vadd.f32 %v683, %v725
      %727 = vdwg.mxu0
      %v728 = vmax.f32 %v706, 0.0
      %v729 = vmax.f32 %v726, 0.0
      %s730 = scalar_lea.vmem %s3, 8
      %v731 = vld [vmem:[%s730] sm:$0xff]
      %s732 = scalar_lea.vmem %s5, 8
      %v733 = vld [vmem:[%s732] sm:$0xff]
      %734 = vrot.lane.b32.xlu0 %v728, 17
      %v735 = vpop.permute.xlu0 %734
      %736 = vrot.lane.b32.xlu0 %v729, 17
      %v737 = vpop.permute.xlu0 %736
      %v738 = vsel %vm325, %v735, %v737
      %v739 = vsel %vm325, %v737, %v735
      %v740 = vsel %vm331, %v739, 0.0
      %v741 = vsel %vm332, %v738, 0.0
      %742 = vst [vmem:[#allocation2] sm:$0xff] %v740
      %743 = vst [vmem:[#allocation2 + $0x8] sm:$0xff] %v741
      %744 = vrot.lane.b32.xlu0 %v728, 16
      %v745 = vpop.permute.xlu0 %744
      %746 = vrot.lane.b32.xlu0 %v729, 16
      %v747 = vpop.permute.xlu0 %746
      %v748 = vsel %vm341, %v745, %v747
      %v749 = vsel %vm341, %v747, %v745
      %v750 = vsel %vm347, %v749, 0.0
      %v751 = vsel %vm348, %v748, 0.0
      %752 = vst [vmem:[#allocation2 + $0x10] sm:$0xff] %v750
      %753 = vst [vmem:[#allocation2 + $0x18] sm:$0xff] %v751
      %754 = vrot.lane.b32.xlu0 %v728, 15
      %v755 = vpop.permute.xlu0 %754
      %756 = vrot.lane.b32.xlu0 %v729, 15
      %v757 = vpop.permute.xlu0 %756
      %v758 = vsel %vm357, %v755, %v757
      %v759 = vsel %vm357, %v757, %v755
      %v760 = vsel %vm363, %v759, 0.0
      %v761 = vsel %vm364, %v758, 0.0
      %762 = vst [vmem:[#allocation2 + $0x20] sm:$0xff] %v760
      %763 = vst [vmem:[#allocation2 + $0x28] sm:$0xff] %v761
      %764 = vrot.lane.b32.xlu0 %v728, 1
      %v765 = vpop.permute.xlu0 %764
      %766 = vrot.lane.b32.xlu0 %v729, 1
      %v767 = vpop.permute.xlu0 %766
      %v768 = vsel %vm373, %v765, %v767
      %v769 = vsel %vm373, %v767, %v765
      %v770 = vsel %vm379, %v769, 0.0
      %v771 = vsel %vm380, %v768, 0.0
      %772 = vst [vmem:[#allocation2 + $0x30] sm:$0xff] %v770
      %773 = vst [vmem:[#allocation2 + $0x38] sm:$0xff] %v771
      %774 = vst [vmem:[#allocation2 + $0x40] sm:$0xff] %v728
      %775 = vst [vmem:[#allocation2 + $0x48] sm:$0xff] %v729
      %776 = vrot.lane.b32.xlu0 %v728, 127
      %v777 = vpop.permute.xlu0 %776
      %778 = vrot.lane.b32.xlu0 %v729, 127
      %v779 = vpop.permute.xlu0 %778
      %v780 = vsel %vm391, %v777, %v779
      %v781 = vsel %vm391, %v779, %v777
      %v782 = vsel %vm397, %v780, 0.0
      %v783 = vsel %vm398, %v781, 0.0
      %784 = vst [vmem:[#allocation2 + $0x50] sm:$0xff] %v782
      %785 = vst [vmem:[#allocation2 + $0x58] sm:$0xff] %v783
      %786 = vrot.lane.b32.xlu0 %v728, 113
      %v787 = vpop.permute.xlu0 %786
      %788 = vrot.lane.b32.xlu0 %v729, 113
      %v789 = vpop.permute.xlu0 %788
      %v790 = vsel %vm407, %v787, %v789
      %v791 = vsel %vm407, %v789, %v787
      %v792 = vsel %vm413, %v790, 0.0
      %v793 = vsel %vm414, %v791, 0.0
      %794 = vst [vmem:[#allocation2 + $0x60] sm:$0xff] %v792
      %795 = vst [vmem:[#allocation2 + $0x68] sm:$0xff] %v793
      %796 = vrot.lane.b32.xlu0 %v728, 112
      %v797 = vpop.permute.xlu0 %796
      %798 = vrot.lane.b32.xlu0 %v729, 112
      %v799 = vpop.permute.xlu0 %798
      %v800 = vsel %vm423, %v797, %v799
      %v801 = vsel %vm423, %v799, %v797
      %v802 = vsel %vm429, %v800, 0.0
      %v803 = vsel %vm430, %v801, 0.0
      %804 = vst [vmem:[#allocation2 + $0x70] sm:$0xff] %v802
      %805 = vst [vmem:[#allocation2 + $0x78] sm:$0xff] %v803
      %806 = vrot.lane.b32.xlu0 %v728, 111
      %v807 = vpop.permute.xlu0 %806
      %808 = vrot.lane.b32.xlu0 %v729, 111
      %v809 = vpop.permute.xlu0 %808
      %v810 = vsel %vm439, %v807, %v809
      %v811 = vsel %vm439, %v809, %v807
      %v812 = vsel %vm445, %v810, 0.0
      %v813 = vsel %vm446, %v811, 0.0
      %814 = vst [vmem:[#allocation2 + $0x80] sm:$0xff] %v812
      %815 = vst [vmem:[#allocation2 + $0x88] sm:$0xff] %v813
      %v816 = vld [vmem:[#allocation2] sm:$0xff]
      %v817 = vld [vmem:[#allocation2 + $0x8] sm:$0xff]
      %v818 = vld [vmem:[#allocation2 + $0x10] sm:$0xff]
      %v819 = vld [vmem:[#allocation2 + $0x18] sm:$0xff]
      %v820 = vld [vmem:[#allocation2 + $0x20] sm:$0xff]
      %v821 = vld [vmem:[#allocation2 + $0x28] sm:$0xff]
      %v822 = vld [vmem:[#allocation2 + $0x30] sm:$0xff]
      %v823 = vld [vmem:[#allocation2 + $0x38] sm:$0xff]
      %v824 = vld [vmem:[#allocation2 + $0x40] sm:$0xff]
      %v825 = vld [vmem:[#allocation2 + $0x48] sm:$0xff]
      %v826 = vld [vmem:[#allocation2 + $0x50] sm:$0xff]
      %v827 = vld [vmem:[#allocation2 + $0x58] sm:$0xff]
      %v828 = vld [vmem:[#allocation2 + $0x60] sm:$0xff]
      %v829 = vld [vmem:[#allocation2 + $0x68] sm:$0xff]
      %v830 = vld [vmem:[#allocation2 + $0x70] sm:$0xff]
      %v831 = vld [vmem:[#allocation2 + $0x78] sm:$0xff]
      %v832 = vld [vmem:[#allocation2 + $0x80] sm:$0xff]
      %v833 = vld [vmem:[#allocation2 + $0x88] sm:$0xff]
      %835 = vset.pattern.permute.xlu0 0
      %836 = vperm.xlu0 %835, %v733
      %v837 = vpop.permute.xlu0 %836
      %v840 = vsel %vm474, %v731, 0
      %842 = vmatpush.msra.mxu0 0.0
      %843 = vmatpush.msra.mxu0 0.0
      %844 = vmatpush.msra.mxu0 0.0
      %845 = vmatpush.msra.mxu0 0.0
      %846 = vmatpush.msra.mxu0 0.0
      %847 = vmatpush.msra.mxu0 0.0
      %848 = vmatpush.msra.mxu0 0.0
      %849 = vmatpush.msra.mxu0 %v832
      %850 = vmatpush.msra.mxu0 %v830
      %851 = vmatpush.msra.mxu0 %v828
      %852 = vmatpush.msra.mxu0 %v826
      %853 = vmatpush.msra.mxu0 %v824
      %854 = vmatpush.msra.mxu0 %v822
      %855 = vmatpush.msra.mxu0 %v820
      %856 = vmatpush.msra.mxu0 %v818
      %857 = vmatpush.msra.mxu0 %v816
      %858 = vmatmul.f32.gmra.mxu0 %v840
      %v859 = vpop.f32.mrf.mxu0
      %v860 = vadd.f32 %v837, %v859
      %861 = vdwg.mxu0
      %862 = vmatpush.msra.mxu0 0.0
      %863 = vmatpush.msra.mxu0 0.0
      %864 = vmatpush.msra.mxu0 0.0
      %865 = vmatpush.msra.mxu0 0.0
      %866 = vmatpush.msra.mxu0 0.0
      %867 = vmatpush.msra.mxu0 0.0
      %868 = vmatpush.msra.mxu0 0.0
      %869 = vmatpush.msra.mxu0 %v833
      %870 = vmatpush.msra.mxu0 %v831
      %871 = vmatpush.msra.mxu0 %v829
      %872 = vmatpush.msra.mxu0 %v827
      %873 = vmatpush.msra.mxu0 %v825
      %874 = vmatpush.msra.mxu0 %v823
      %875 = vmatpush.msra.mxu0 %v821
      %876 = vmatpush.msra.mxu0 %v819
      %877 = vmatpush.msra.mxu0 %v817
      %878 = vmatmul.f32.gmra.mxu0 %v840
      %v879 = vpop.f32.mrf.mxu0
      %v880 = vadd.f32 %v837, %v879
      %881 = vdwg.mxu0
      %v882 = vmax.f32 %v860, 0.0
      %v883 = vmax.f32 %v880, 0.0
      %884 = vrot.lane.b32.xlu0 %v882, 127
      %v885 = vpop.permute.xlu0 %884
      %886 = vrot.lane.b32.xlu0 %v883, 127
      %v887 = vpop.permute.xlu0 %886
      %v888 = vsel %vm391, %v885, %v887
      %v889 = vsel %vm391, %v887, %v885
      %890 = vrot.lane.b32.xlu0 %v882, 1
      %v891 = vpop.permute.xlu0 %890
      %892 = vrot.lane.b32.xlu0 %v883, 1
      %v893 = vpop.permute.xlu0 %892
      %v894 = vsel %vm373, %v891, %v893
      %v895 = vsel %vm373, %v893, %v891
      %v896 = vsel %vm535, %v888, %v895
      %v897 = vsel %vm536, %v889, %v894
      %v898 = vmax.f32 %v882, %v896
      %v899 = vmax.f32 %v883, %v897
      %900 = vrot.lane.b32.xlu0 %v898, 112
      %v901 = vpop.permute.xlu0 %900
      %902 = vrot.lane.b32.xlu0 %v899, 112
      %v903 = vpop.permute.xlu0 %902
      %v904 = vsel %vm423, %v901, %v903
      %v905 = vsel %vm423, %v903, %v901
      %906 = vrot.lane.b32.xlu0 %v898, 16
      %v907 = vpop.permute.xlu0 %906
      %908 = vrot.lane.b32.xlu0 %v899, 16
      %v909 = vpop.permute.xlu0 %908
      %v910 = vsel %vm341, %v907, %v909
      %v911 = vsel %vm341, %v909, %v907
      %v912 = vsel %vm556, %v904, %v911
      %v913 = vsel %vm557, %v905, %v910
      %v914 = vmax.f32 %v898, %v912
      %v915 = vmax.f32 %v899, %v913
      %vm916 = vcmp.eq.f32.partialorder %v882, %v914
      %vm917 = vcmp.eq.f32.partialorder %v883, %v915
      %vm918 = vcmp.ne.f32.partialorder %v896, %v914
      %vm919 = vcmp.ne.f32.partialorder %v897, %v915
      %vm920 = vmor %vm535, %vm918
      %vm921 = vmor %vm536, %vm919
      %vm922 = vmand %vm916, %vm920
      %vm923 = vmand %vm917, %vm921
      %vm924 = vcmp.ne.f32.partialorder %v912, %v914
      %vm925 = vcmp.ne.f32.partialorder %v913, %v915
      %vm926 = vmor %vm556, %vm924
      %vm927 = vmor %vm557, %vm925
      %vm928 = vmand %vm922, %vm926
      %vm929 = vmand %vm923, %vm927
      %v930 = vsel %vm928, %v882, 0.0
      %v931 = vsel %vm929, %v883, 0.0
      %s932 = scalar_lea.vmem %s4, 8
      %v933 = vld [vmem:[%s932] sm:$0xff]
      %s934 = scalar_lea.vmem %s6, 8
      %v935 = vld [vmem:[%s934] sm:$0xff]
      %936 = vrot.lane.b32.xlu0 %v930, 17
      %v937 = vpop.permute.xlu0 %936
      %938 = vrot.lane.b32.xlu0 %v931, 17
      %v939 = vpop.permute.xlu0 %938
      %v940 = vsel %vm325, %v937, %v939
      %v941 = vsel %vm325, %v939, %v937
      %v942 = vsel %vm331, %v941, 0.0
      %v943 = vsel %vm332, %v940, 0.0
      %944 = vst [vmem:[#allocation2] sm:$0xff] %v942
      %945 = vst [vmem:[#allocation2 + $0x8] sm:$0xff] %v943
      %946 = vrot.lane.b32.xlu0 %v930, 16
      %v947 = vpop.permute.xlu0 %946
      %948 = vrot.lane.b32.xlu0 %v931, 16
      %v949 = vpop.permute.xlu0 %948
      %v950 = vsel %vm341, %v947, %v949
      %v951 = vsel %vm341, %v949, %v947
      %v952 = vsel %vm347, %v951, 0.0
      %v953 = vsel %vm348, %v950, 0.0
      %954 = vst [vmem:[#allocation2 + $0x10] sm:$0xff] %v952
      %955 = vst [vmem:[#allocation2 + $0x18] sm:$0xff] %v953
      %956 = vrot.lane.b32.xlu0 %v930, 15
      %v957 = vpop.permute.xlu0 %956
      %958 = vrot.lane.b32.xlu0 %v931, 15
      %v959 = vpop.permute.xlu0 %958
      %v960 = vsel %vm357, %v957, %v959
      %v961 = vsel %vm357, %v959, %v957
      %v962 = vsel %vm363, %v961, 0.0
      %v963 = vsel %vm364, %v960, 0.0
      %964 = vst [vmem:[#allocation2 + $0x20] sm:$0xff] %v962
      %965 = vst [vmem:[#allocation2 + $0x28] sm:$0xff] %v963
      %966 = vrot.lane.b32.xlu0 %v930, 1
      %v967 = vpop.permute.xlu0 %966
      %968 = vrot.lane.b32.xlu0 %v931, 1
      %v969 = vpop.permute.xlu0 %968
      %v970 = vsel %vm373, %v967, %v969
      %v971 = vsel %vm373, %v969, %v967
      %v972 = vsel %vm379, %v971, 0.0
      %v973 = vsel %vm380, %v970, 0.0
      %974 = vst [vmem:[#allocation2 + $0x30] sm:$0xff] %v972
      %975 = vst [vmem:[#allocation2 + $0x38] sm:$0xff] %v973
      %976 = vst [vmem:[#allocation2 + $0x40] sm:$0xff] %v930
      %977 = vst [vmem:[#allocation2 + $0x48] sm:$0xff] %v931
      %978 = vrot.lane.b32.xlu0 %v930, 127
      %v979 = vpop.permute.xlu0 %978
      %980 = vrot.lane.b32.xlu0 %v931, 127
      %v981 = vpop.permute.xlu0 %980
      %v982 = vsel %vm391, %v979, %v981
      %v983 = vsel %vm391, %v981, %v979
      %v984 = vsel %vm397, %v982, 0.0
      %v985 = vsel %vm398, %v983, 0.0
      %986 = vst [vmem:[#allocation2 + $0x50] sm:$0xff] %v984
      %987 = vst [vmem:[#allocation2 + $0x58] sm:$0xff] %v985
      %988 = vrot.lane.b32.xlu0 %v930, 113
      %v989 = vpop.permute.xlu0 %988
      %990 = vrot.lane.b32.xlu0 %v931, 113
      %v991 = vpop.permute.xlu0 %990
      %v992 = vsel %vm407, %v989, %v991
      %v993 = vsel %vm407, %v991, %v989
      %v994 = vsel %vm413, %v992, 0.0
      %v995 = vsel %vm414, %v993, 0.0
      %996 = vst [vmem:[#allocation2 + $0x60] sm:$0xff] %v994
      %997 = vst [vmem:[#allocation2 + $0x68] sm:$0xff] %v995
      %998 = vrot.lane.b32.xlu0 %v930, 112
      %v999 = vpop.permute.xlu0 %998
      %1000 = vrot.lane.b32.xlu0 %v931, 112
      %v1001 = vpop.permute.xlu0 %1000
      %v1002 = vsel %vm423, %v999, %v1001
      %v1003 = vsel %vm423, %v1001, %v999
      %v1004 = vsel %vm429, %v1002, 0.0
      %v1005 = vsel %vm430, %v1003, 0.0
      %1006 = vst [vmem:[#allocation2 + $0x70] sm:$0xff] %v1004
      %1007 = vst [vmem:[#allocation2 + $0x78] sm:$0xff] %v1005
      %1008 = vrot.lane.b32.xlu0 %v930, 111
      %v1009 = vpop.permute.xlu0 %1008
      %1010 = vrot.lane.b32.xlu0 %v931, 111
      %v1011 = vpop.permute.xlu0 %1010
      %v1012 = vsel %vm439, %v1009, %v1011
      %v1013 = vsel %vm439, %v1011, %v1009
      %v1014 = vsel %vm445, %v1012, 0.0
      %v1015 = vsel %vm446, %v1013, 0.0
      %1016 = vst [vmem:[#allocation2 + $0x80] sm:$0xff] %v1014
      %1017 = vst [vmem:[#allocation2 + $0x88] sm:$0xff] %v1015
      %v1018 = vld [vmem:[#allocation2] sm:$0xff]
      %v1019 = vld [vmem:[#allocation2 + $0x8] sm:$0xff]
      %v1020 = vld [vmem:[#allocation2 + $0x10] sm:$0xff]
      %v1021 = vld [vmem:[#allocation2 + $0x18] sm:$0xff]
      %v1022 = vld [vmem:[#allocation2 + $0x20] sm:$0xff]
      %v1023 = vld [vmem:[#allocation2 + $0x28] sm:$0xff]
      %v1024 = vld [vmem:[#allocation2 + $0x30] sm:$0xff]
      %v1025 = vld [vmem:[#allocation2 + $0x38] sm:$0xff]
      %v1026 = vld [vmem:[#allocation2 + $0x40] sm:$0xff]
      %v1027 = vld [vmem:[#allocation2 + $0x48] sm:$0xff]
      %v1028 = vld [vmem:[#allocation2 + $0x50] sm:$0xff]
      %v1029 = vld [vmem:[#allocation2 + $0x58] sm:$0xff]
      %v1030 = vld [vmem:[#allocation2 + $0x60] sm:$0xff]
      %v1031 = vld [vmem:[#allocation2 + $0x68] sm:$0xff]
      %v1032 = vld [vmem:[#allocation2 + $0x70] sm:$0xff]
      %v1033 = vld [vmem:[#allocation2 + $0x78] sm:$0xff]
      %v1034 = vld [vmem:[#allocation2 + $0x80] sm:$0xff]
      %v1035 = vld [vmem:[#allocation2 + $0x88] sm:$0xff]
      %1037 = vset.pattern.permute.xlu0 0
      %1038 = vperm.xlu0 %1037, %v935
      %v1039 = vpop.permute.xlu0 %1038
      %v1042 = vsel %vm474, %v933, 0
      %1044 = vmatpush.msra.mxu0 0.0
      %1045 = vmatpush.msra.mxu0 0.0
      %1046 = vmatpush.msra.mxu0 0.0
      %1047 = vmatpush.msra.mxu0 0.0
      %1048 = vmatpush.msra.mxu0 0.0
      %1049 = vmatpush.msra.mxu0 0.0
      %1050 = vmatpush.msra.mxu0 0.0
      %1051 = vmatpush.msra.mxu0 %v1034
      %1052 = vmatpush.msra.mxu0 %v1032
      %1053 = vmatpush.msra.mxu0 %v1030
      %1054 = vmatpush.msra.mxu0 %v1028
      %1055 = vmatpush.msra.mxu0 %v1026
      %1056 = vmatpush.msra.mxu0 %v1024
      %1057 = vmatpush.msra.mxu0 %v1022
      %1058 = vmatpush.msra.mxu0 %v1020
      %1059 = vmatpush.msra.mxu0 %v1018
      %1060 = vmatmul.f32.gmra.mxu0 %v1042
      %v1061 = vpop.f32.mrf.mxu0
      %v1062 = vadd.f32 %v1039, %v1061
      %1063 = vdwg.mxu0
      %1064 = vmatpush.msra.mxu0 0.0
      %1065 = vmatpush.msra.mxu0 0.0
      %1066 = vmatpush.msra.mxu0 0.0
      %1067 = vmatpush.msra.mxu0 0.0
      %1068 = vmatpush.msra.mxu0 0.0
      %1069 = vmatpush.msra.mxu0 0.0
      %1070 = vmatpush.msra.mxu0 0.0
      %1071 = vmatpush.msra.mxu0 %v1035
      %1072 = vmatpush.msra.mxu0 %v1033
      %1073 = vmatpush.msra.mxu0 %v1031
      %1074 = vmatpush.msra.mxu0 %v1029
      %1075 = vmatpush.msra.mxu0 %v1027
      %1076 = vmatpush.msra.mxu0 %v1025
      %1077 = vmatpush.msra.mxu0 %v1023
      %1078 = vmatpush.msra.mxu0 %v1021
      %1079 = vmatpush.msra.mxu0 %v1019
      %1080 = vmatmul.f32.gmra.mxu0 %v1042
      %v1081 = vpop.f32.mrf.mxu0
      %v1082 = vadd.f32 %v1039, %v1081
      %1083 = vdwg.mxu0
      %v1084 = vmax.f32 %v1062, 0.0
      %v1085 = vmax.f32 %v1082, 0.0
      %1086 = vst [vmem:[%s278] sm:$0xff] %v1084
      %1087 = vst [vmem:[%s278 + $0x8] sm:$0xff] %v1085
      %p1088 = scmp.lt.s32.totalorder %s18, 1
      %s1089 = scalar_select %p1088, %s18, 1
      %s1090 = smul.addr %s1089, 2
      %s1091 = smul.addr %s1090, 8
      %s1092 = scalar_lea.vmem %s7, %s1091
      // Predicated region
      $region49: #{multi_cae_forward.1} parent=47 // pred_check
        %p1093 = pneg %p188
      $region50: #{multi_cae_forward.1} parent=47 // pred_check_branch
        %1095 = sbr.rel (%p1093) target = $region52
      $region51: #{multi_cae_forward.1} parent=47 // pred_region
        _
      $region52: #{multi_cae_forward.1} parent=47 // pred_fallthru
        _
    $region48: #{multi_cae_forward.1} parent=5 // pred_fallthru
      _
    %p1096 = scmp.le.s32.totalorder 2, %s13
    // Predicated region
    $region53: #{multi_cae_forward.1} parent=5 // pred_check
      %p1097 = pneg %p1096
    $region54: #{multi_cae_forward.1} parent=5 // pred_check_branch
      %1099 = sbr.rel (%p1097) target = $region56
    $region55: #{multi_cae_forward.1} parent=5 // pred_region
      %s1100 = ssub.s32 %s13, 2
      // Predicated region
      $region57: #{multi_cae_forward.1} parent=55 // pred_check
        %p1101 = pneg %p194
      $region58: #{multi_cae_forward.1} parent=55 // pred_check_branch
        %1103 = sbr.rel (%p1101) target = $region60
      $region59: #{multi_cae_forward.1} parent=55 // pred_region
        %p1104 = scmp.lt.s32.totalorder %s19, 1
        %s1105 = scalar_select %p1104, %s19, 1
        %s1106 = smul.addr %s1105, 2
        %s1107 = smul.addr %s1106, 8
        %s1108 = scalar_lea.vmem %s7, %s1107
      $region60: #{multi_cae_forward.1} parent=55 // pred_fallthru
        _
    $region56: #{multi_cae_forward.1} parent=5 // pred_fallthru
      _
  $region6: #{multi_cae_forward.1} parent=0 // loop_footer
    %s17 = sadd.s32 1, %s13
  $region7: #{multi_cae_forward.1} parent=0 // loop_footer_branch
    %12 = sbr.rel target = $region3
  $region8: #{multi_cae_forward.1} parent=0 // loop_exit
    _

</llo_original>
